<compile_context>
chip_gen: v6e
topology: v6e:2x2x1
jax: 0.10.0
libtpu: 0.0.40
codegen_flags: <defaults>
</compile_context>

<pallas_src>
import jax
import jax.numpy as jnp
from jax.experimental import pallas as pl
from jax.experimental.pallas import tpu as pltpu


def graph_layer_kernel(g_ref, h_ref, wout_bd_ref, win_bd_ref, bias_ref, out_ref):
    bt, F, _ = g_ref.shape
    FE = h_ref.shape[1]
    E = FE // F

    # --- step 1: per-field out-transform fused into ONE block-diagonal MXU dot ---
    # h_out[b, f*E + d] = sum_e W_out[f, d, e] * h[b, f, e]
    h_out = jnp.dot(h_ref[...], wout_bd_ref[...],
                    preferred_element_type=jnp.float32)          # (bt, F*E) f32

    # --- step 2: graph aggregation: F FMA steps over a (bt, F, E) accumulator ---
    g = g_ref[...]                                               # hoisted single read
    aggr = g[:, :, 0:1] * h_out[:, 0:E][:, None, :]
    for j in range(1, F):
        aggr = aggr + g[:, :, j:j + 1] * h_out[:, j * E:(j + 1) * E][:, None, :]

    # --- step 3: per-field in-transform fused into ONE block-diag dot + bias ---
    aggr_flat = aggr.reshape(bt, FE).astype(win_bd_ref.dtype)
    out = jnp.dot(aggr_flat, win_bd_ref[...],
                  preferred_element_type=jnp.float32) + bias_ref[...]
    out_ref[...] = out.astype(out_ref.dtype)                     # single full-tile store


def _block_diag_t(w):
    """(F, E, E) -> (F*E, F*E) block-diagonal matrix with W[f]^T as block (f, f).

    bd[f*E + e, g*E + d] = delta(f, g) * w[f, d, e], so that
    (h_flat @ bd)[b, f*E + d] = sum_e w[f, d, e] * h[b, f, e].
    """
    F, E, _ = w.shape
    eye = jnp.eye(F, dtype=w.dtype)
    return jnp.einsum('fg,fde->fegd', eye, w).reshape(F * E, F * E)


def graph_layer(g, h, w_in, w_out, bias_p, *, batch_tile=256,
                compute_dtype=jnp.bfloat16):
    B, F, E = h.shape
    assert g.shape == (B, F, F)
    assert w_in.shape == (F, E, E) and w_out.shape == (F, E, E)
    FE = F * E

    # ---- layout plumbing lives in the wrapper, not the kernel ----
    h_flat = h.reshape(B, FE).astype(compute_dtype)          # lane-dense input stream
    wout_bd = _block_diag_t(w_out).astype(compute_dtype)     # (FE, FE) VMEM-resident
    win_bd = _block_diag_t(w_in).astype(compute_dtype)       # (FE, FE) VMEM-resident
    bias_flat = jnp.tile(bias_p.astype(jnp.float32), F).reshape(1, FE)
    g = g.astype(jnp.float32)

    # ---- bounded batch tile + padded cdiv grid (no giant-tile fallback) ----
    bt = min(batch_tile, B)
    n_tiles = pl.cdiv(B, bt)
    B_pad = n_tiles * bt
    if B_pad != B:
        g = jnp.pad(g, ((0, B_pad - B), (0, 0), (0, 0)))
        h_flat = jnp.pad(h_flat, ((0, B_pad - B), (0, 0)))

    out_flat = pl.pallas_call(
        graph_layer_kernel,
        out_shape=jax.ShapeDtypeStruct((B_pad, FE), jnp.float32),
        grid=(n_tiles,),
        in_specs=[
            # TODO(synk): g's (F, F) trailing dims lane-pad ~16x in VMEM; harmless at
            # this size, worth flattening/pre-expanding only if F grows large.
            pl.BlockSpec((bt, F, F), lambda i: (i, 0, 0)),    # g       (tiled over batch)
            pl.BlockSpec((bt, FE), lambda i: (i, 0)),         # h flat  (tiled over batch)
            pl.BlockSpec((FE, FE), lambda i: (0, 0)),         # blockdiag(W_out^T)
            pl.BlockSpec((FE, FE), lambda i: (0, 0)),         # blockdiag(W_in^T)
            pl.BlockSpec((1, FE), lambda i: (0, 0)),          # bias tiled to F*E
        ],
        out_specs=pl.BlockSpec((bt, FE), lambda i: (i, 0)),
        compiler_params=pltpu.CompilerParams(
            dimension_semantics=("parallel",)),               # megacore on v7x
    )(g, h_flat, wout_bd, win_bd, bias_flat)

    return out_flat[:B].reshape(B, F, E)


def graph_layer_reference(g, h, w_in, w_out, bias_p):
    """Pure-JAX reference matching the PyTorch forward exactly."""
    h_out = jnp.einsum('fde,bfe->bfd', w_out, h)
    aggr = jnp.einsum('bij,bjd->bid', g, h_out)
    return jnp.einsum('fde,bfe->bfd', w_in, aggr) + bias_p


if __name__ == "__main__":
    B, F, E = 16, 8, 32      # batch, num_fields, embed_size

    key = jax.random.PRNGKey(0)
    kg, kh, kwi, kwo, kb = jax.random.split(key, 5)

    g = jax.random.uniform(kg, (B, F, F), dtype=jnp.float32)
    h = jax.random.normal(kh, (B, F, E), dtype=jnp.float32)
    xavier_std = (2.0 / (E + E)) ** 0.5          # xavier_normal_ for (E, E) matrices
    w_in = jax.random.normal(kwi, (F, E, E), jnp.float32) * xavier_std
    w_out = jax.random.normal(kwo, (F, E, E), jnp.float32) * xavier_std
    # Module default bias init is zeros; use a small random bias so the add path
    # is actually exercised by the check.
    bias_p = jax.random.normal(kb, (E,), jnp.float32) * 0.1

    out = jax.block_until_ready(graph_layer(g, h, w_in, w_out, bias_p))
    ref = jax.block_until_ready(graph_layer_reference(g, h, w_in, w_out, bias_p))

    assert out.shape == (B, F, E), out.shape
    # bf16 MXU operands (per perf review) -> looser tolerance than the f32 path.
    max_err = jnp.max(jnp.abs(out - ref))
    assert jnp.allclose(out, ref, rtol=5e-2, atol=5e-2), f"max abs err = {max_err}"

    print("KERNEL_OK")
</pallas_src>

<mosaic_0001>
module attributes {stable_mosaic.version = 11 : i64} {
  func.func @graph_layer_kernel(%arg0: i32, %arg1: memref<16x8x8xf32, #tpu.memory_space<vmem>>, %arg2: memref<16x256xbf16, #tpu.memory_space<vmem>>, %arg3: memref<256x256xbf16, #tpu.memory_space<vmem>>, %arg4: memref<256x256xbf16, #tpu.memory_space<vmem>>, %arg5: memref<1x256xf32, #tpu.memory_space<vmem>>, %arg6: memref<16x256xf32, #tpu.memory_space<vmem>>) attributes {dimension_semantics = [#tpu.dimension_semantics<parallel>], iteration_bounds = array<i64: 1>, scalar_prefetch = 0 : i64, scratch_operands = 0 : i64, tpu.core_type = #tpu.core_type<tc>, window_params = [{transform_indices = @transform_0, window_bounds = array<i64: 16, 8, 8>}, {transform_indices = @transform_1, window_bounds = array<i64: 16, 256>}, {pipeline_mode = #tpu.pipeline_mode<synchronous>, transform_indices = @transform_2, window_bounds = array<i64: 256, 256>}, {pipeline_mode = #tpu.pipeline_mode<synchronous>, transform_indices = @transform_3, window_bounds = array<i64: 256, 256>}, {pipeline_mode = #tpu.pipeline_mode<synchronous>, transform_indices = @transform_4, window_bounds = array<i64: 1, 256>}, {transform_indices = @transform_5, window_bounds = array<i64: 16, 256>}]} {
    %c0 = arith.constant 0 : index
    %c0_0 = arith.constant 0 : index
    %0 = vector.load %arg2[%c0, %c0_0] : memref<16x256xbf16, #tpu.memory_space<vmem>>, vector<16x256xbf16>
    %c0_1 = arith.constant 0 : index
    %c0_2 = arith.constant 0 : index
    %1 = vector.load %arg3[%c0_1, %c0_2] : memref<256x256xbf16, #tpu.memory_space<vmem>>, vector<256x256xbf16>
    %cst = arith.constant dense<0.000000e+00> : vector<16x256xf32>
    %2 = tpu.matmul %0, %1, %cst {dimension_numbers = #tpu.dot_dimension_numbers<[1], [0], [0], [1], [0, 0, 1, 1], [], []>} : vector<16x256xbf16>, vector<256x256xbf16>, vector<16x256xf32> -> vector<16x256xf32>
    %c0_3 = arith.constant 0 : index
    %c0_4 = arith.constant 0 : index
    %c0_5 = arith.constant 0 : index
    %3 = vector.load %arg1[%c0_3, %c0_4, %c0_5] : memref<16x8x8xf32, #tpu.memory_space<vmem>>, vector<16x8x8xf32>
    %4 = vector.extract_strided_slice %3 {offsets = [0, 0, 0], sizes = [16, 8, 1], strides = [1, 1, 1]} : vector<16x8x8xf32> to vector<16x8x1xf32>
    %5 = vector.extract_strided_slice %2 {offsets = [0, 0], sizes = [16, 32], strides = [1, 1]} : vector<16x256xf32> to vector<16x32xf32>
    %6 = vector.shape_cast %5 : vector<16x32xf32> to vector<16x1x32xf32>
    %7 = vector.broadcast %4 : vector<16x8x1xf32> to vector<16x8x32xf32>
    %8 = vector.broadcast %6 : vector<16x1x32xf32> to vector<16x8x32xf32>
    %9 = arith.mulf %7, %8 : vector<16x8x32xf32>
    %10 = vector.extract_strided_slice %3 {offsets = [0, 0, 1], sizes = [16, 8, 1], strides = [1, 1, 1]} : vector<16x8x8xf32> to vector<16x8x1xf32>
    %11 = vector.extract_strided_slice %2 {offsets = [0, 32], sizes = [16, 32], strides = [1, 1]} : vector<16x256xf32> to vector<16x32xf32>
    %12 = vector.shape_cast %11 : vector<16x32xf32> to vector<16x1x32xf32>
    %13 = vector.broadcast %10 : vector<16x8x1xf32> to vector<16x8x32xf32>
    %14 = vector.broadcast %12 : vector<16x1x32xf32> to vector<16x8x32xf32>
    %15 = arith.mulf %13, %14 : vector<16x8x32xf32>
    %16 = arith.addf %9, %15 : vector<16x8x32xf32>
    %17 = vector.extract_strided_slice %3 {offsets = [0, 0, 2], sizes = [16, 8, 1], strides = [1, 1, 1]} : vector<16x8x8xf32> to vector<16x8x1xf32>
    %18 = vector.extract_strided_slice %2 {offsets = [0, 64], sizes = [16, 32], strides = [1, 1]} : vector<16x256xf32> to vector<16x32xf32>
    %19 = vector.shape_cast %18 : vector<16x32xf32> to vector<16x1x32xf32>
    %20 = vector.broadcast %17 : vector<16x8x1xf32> to vector<16x8x32xf32>
    %21 = vector.broadcast %19 : vector<16x1x32xf32> to vector<16x8x32xf32>
    %22 = arith.mulf %20, %21 : vector<16x8x32xf32>
    %23 = arith.addf %16, %22 : vector<16x8x32xf32>
    %24 = vector.extract_strided_slice %3 {offsets = [0, 0, 3], sizes = [16, 8, 1], strides = [1, 1, 1]} : vector<16x8x8xf32> to vector<16x8x1xf32>
    %25 = vector.extract_strided_slice %2 {offsets = [0, 96], sizes = [16, 32], strides = [1, 1]} : vector<16x256xf32> to vector<16x32xf32>
    %26 = vector.shape_cast %25 : vector<16x32xf32> to vector<16x1x32xf32>
    %27 = vector.broadcast %24 : vector<16x8x1xf32> to vector<16x8x32xf32>
    %28 = vector.broadcast %26 : vector<16x1x32xf32> to vector<16x8x32xf32>
    %29 = arith.mulf %27, %28 : vector<16x8x32xf32>
    %30 = arith.addf %23, %29 : vector<16x8x32xf32>
    %31 = vector.extract_strided_slice %3 {offsets = [0, 0, 4], sizes = [16, 8, 1], strides = [1, 1, 1]} : vector<16x8x8xf32> to vector<16x8x1xf32>
    %32 = vector.extract_strided_slice %2 {offsets = [0, 128], sizes = [16, 32], strides = [1, 1]} : vector<16x256xf32> to vector<16x32xf32>
    %33 = vector.shape_cast %32 : vector<16x32xf32> to vector<16x1x32xf32>
    %34 = vector.broadcast %31 : vector<16x8x1xf32> to vector<16x8x32xf32>
    %35 = vector.broadcast %33 : vector<16x1x32xf32> to vector<16x8x32xf32>
    %36 = arith.mulf %34, %35 : vector<16x8x32xf32>
    %37 = arith.addf %30, %36 : vector<16x8x32xf32>
    %38 = vector.extract_strided_slice %3 {offsets = [0, 0, 5], sizes = [16, 8, 1], strides = [1, 1, 1]} : vector<16x8x8xf32> to vector<16x8x1xf32>
    %39 = vector.extract_strided_slice %2 {offsets = [0, 160], sizes = [16, 32], strides = [1, 1]} : vector<16x256xf32> to vector<16x32xf32>
    %40 = vector.shape_cast %39 : vector<16x32xf32> to vector<16x1x32xf32>
    %41 = vector.broadcast %38 : vector<16x8x1xf32> to vector<16x8x32xf32>
    %42 = vector.broadcast %40 : vector<16x1x32xf32> to vector<16x8x32xf32>
    %43 = arith.mulf %41, %42 : vector<16x8x32xf32>
    %44 = arith.addf %37, %43 : vector<16x8x32xf32>
    %45 = vector.extract_strided_slice %3 {offsets = [0, 0, 6], sizes = [16, 8, 1], strides = [1, 1, 1]} : vector<16x8x8xf32> to vector<16x8x1xf32>
    %46 = vector.extract_strided_slice %2 {offsets = [0, 192], sizes = [16, 32], strides = [1, 1]} : vector<16x256xf32> to vector<16x32xf32>
    %47 = vector.shape_cast %46 : vector<16x32xf32> to vector<16x1x32xf32>
    %48 = vector.broadcast %45 : vector<16x8x1xf32> to vector<16x8x32xf32>
    %49 = vector.broadcast %47 : vector<16x1x32xf32> to vector<16x8x32xf32>
    %50 = arith.mulf %48, %49 : vector<16x8x32xf32>
    %51 = arith.addf %44, %50 : vector<16x8x32xf32>
    %52 = vector.extract_strided_slice %3 {offsets = [0, 0, 7], sizes = [16, 8, 1], strides = [1, 1, 1]} : vector<16x8x8xf32> to vector<16x8x1xf32>
    %53 = vector.extract_strided_slice %2 {offsets = [0, 224], sizes = [16, 32], strides = [1, 1]} : vector<16x256xf32> to vector<16x32xf32>
    %54 = vector.shape_cast %53 : vector<16x32xf32> to vector<16x1x32xf32>
    %55 = vector.broadcast %52 : vector<16x8x1xf32> to vector<16x8x32xf32>
    %56 = vector.broadcast %54 : vector<16x1x32xf32> to vector<16x8x32xf32>
    %57 = arith.mulf %55, %56 : vector<16x8x32xf32>
    %58 = arith.addf %51, %57 : vector<16x8x32xf32>
    %59 = vector.shape_cast %58 : vector<16x8x32xf32> to vector<16x256xf32>
    %60 = arith.truncf %59 : vector<16x256xf32> to vector<16x256xbf16>
    %c0_6 = arith.constant 0 : index
    %c0_7 = arith.constant 0 : index
    %61 = vector.load %arg4[%c0_6, %c0_7] : memref<256x256xbf16, #tpu.memory_space<vmem>>, vector<256x256xbf16>
    %cst_8 = arith.constant dense<0.000000e+00> : vector<16x256xf32>
    %62 = tpu.matmul %60, %61, %cst_8 {dimension_numbers = #tpu.dot_dimension_numbers<[1], [0], [0], [1], [0, 0, 1, 1], [], []>} : vector<16x256xbf16>, vector<256x256xbf16>, vector<16x256xf32> -> vector<16x256xf32>
    %c0_9 = arith.constant 0 : index
    %c0_10 = arith.constant 0 : index
    %63 = vector.load %arg5[%c0_9, %c0_10] : memref<1x256xf32, #tpu.memory_space<vmem>>, vector<1x256xf32>
    %64 = vector.broadcast %63 : vector<1x256xf32> to vector<16x256xf32>
    %65 = arith.addf %62, %64 : vector<16x256xf32>
    %c0_11 = arith.constant 0 : index
    %c0_12 = arith.constant 0 : index
    %66 = vector.load %arg6[%c0_11, %c0_12] : memref<16x256xf32, #tpu.memory_space<vmem>>, vector<16x256xf32>
    tpu.vector_store %arg6[%c0_11, %c0_12], %65 {strides = array<i32>} : memref<16x256xf32, #tpu.memory_space<vmem>>, vector<16x256xf32>,
    return
  }
  func.func @transform_0(%arg0: i32) -> (i32, i32, i32) {
    %c0_i32 = arith.constant 0 : i32
    %c0_i32_0 = arith.constant 0 : i32
    %c0_i32_1 = arith.constant 0 : i32
    return %arg0, %c0_i32, %c0_i32_0 : i32, i32, i32
  }
  func.func @transform_1(%arg0: i32) -> (i32, i32) {
    %c0_i32 = arith.constant 0 : i32
    %c0_i32_0 = arith.constant 0 : i32
    return %arg0, %c0_i32 : i32, i32
  }
  func.func @transform_2(%arg0: i32) -> (i32, i32) {
    %c0_i32 = arith.constant 0 : i32
    %c0_i32_0 = arith.constant 0 : i32
    %c0_i32_1 = arith.constant 0 : i32
    return %c0_i32, %c0_i32_0 : i32, i32
  }
  func.func @transform_3(%arg0: i32) -> (i32, i32) {
    %c0_i32 = arith.constant 0 : i32
    %c0_i32_0 = arith.constant 0 : i32
    %c0_i32_1 = arith.constant 0 : i32
    return %c0_i32, %c0_i32_0 : i32, i32
  }
  func.func @transform_4(%arg0: i32) -> (i32, i32) {
    %c0_i32 = arith.constant 0 : i32
    %c0_i32_0 = arith.constant 0 : i32
    %c0_i32_1 = arith.constant 0 : i32
    return %c0_i32, %c0_i32_0 : i32, i32
  }
  func.func @transform_5(%arg0: i32) -> (i32, i32) {
    %c0_i32 = arith.constant 0 : i32
    %c0_i32_0 = arith.constant 0 : i32
    return %arg0, %c0_i32 : i32, i32
  }
}

</mosaic_0001>

<llo_original>
// kernel: tpu_custom_call.1
$region0: #{tpu_custom_call.1}
  #allocation0 [shape = 'u32[]', space=smem, size = 0x4, offset = 0x4, fixed_abs, tag = 'smem constant byte address 0x4 - core index']
  #allocation1 [shape = 'u32[144,128]{1,0:T(1,128)}', space=vmem, size = 0x12000, scoped, tag = 'internal scratch']
  %s0 = inlined_call_operand.vmem [shape: f32[16,8,8], index: 0, kind: input, shape index: {}]
  %s1 = inlined_call_operand.vmem [shape: bf16[16,256], index: 1, kind: input, shape index: {}]
  %s2 = inlined_call_operand.hbm [shape: bf16[256,256], index: 2, kind: input, shape index: {}]
  %s3 = inlined_call_operand.hbm [shape: bf16[256,256], index: 3, kind: input, shape index: {}]
  %s4 = inlined_call_operand.vmem [shape: f32[1,256], index: 4, kind: input, shape index: {}]
  %s5 = inlined_call_operand.hbm [shape: f32[16,256], index: 5, kind: output, shape index: {}]
  %s6 = sld [smem:[#allocation0]]
  $region38: #{tpu_custom_call.1} parent=0
    _
  %s8 = ssub.s32 1, %s6
  %s9 = scalar_select 0, %s8, %s6
  $region1: #{tpu_custom_call.1} parent=0
    #allocation2 [shape = 'u8[131072]{0}', space=vmem, size = 0x20000, scoped, tag = 'input window, operand 2, single buffered']
    #allocation3 [shape = 's32[1]{0}', space=sflag, size = 0x4, scoped, tag = 'scoped memory for tpu_custom_call.1']
    #allocation4 [shape = 's32[1]{0}', space=sflag, size = 0x4, scoped, tag = 'scoped memory for tpu_custom_call.1']
    #allocation5 [shape = 'u8[131072]{0}', space=vmem, size = 0x20000, scoped, tag = 'input window, operand 3, single buffered']
    #allocation6 [shape = 's32[1]{0}', space=sflag, size = 0x4, scoped, tag = 'scoped memory for tpu_custom_call.1']
    #allocation7 [shape = 'u8[16384]{0}', space=vmem, size = 0x4000, scoped, tag = 'output window, operand 0, single buffered']
    %10 = vsyncpa [#allocation3], 0
    %11 = vsyncpa [#allocation6], 0
    %12 = vsyncpa [#allocation4], 0
    // Predicated region
    $region2: #{tpu_custom_call.1} parent=1 // pred_check
      _
    $region3: #{tpu_custom_call.1} parent=1 // pred_check_branch
      %14 = sbr.rel (0) target = $region5
    $region4: #{tpu_custom_call.1} parent=1 // pred_region
      _
    $region5: #{tpu_custom_call.1} parent=1 // pred_fallthru
      _
    // Predicated region
    $region6: #{tpu_custom_call.1} parent=1 // pred_check
      _
    $region7: #{tpu_custom_call.1} parent=1 // pred_check_branch
      %16 = sbr.rel (0) target = $region9
    $region8: #{tpu_custom_call.1} parent=1 // pred_region
      _
    $region9: #{tpu_custom_call.1} parent=1 // pred_fallthru
      _
    // Predicated region
    $region10: #{tpu_custom_call.1} parent=1 // pred_check
      _
    $region11: #{tpu_custom_call.1} parent=1 // pred_check_branch
      %18 = sbr.rel (0) target = $region13
    $region12: #{tpu_custom_call.1} parent=1 // pred_region
      %s20 = ssub.s32 4096, 4096
      %21 = vsyncadd [#allocation3], %s20
      %s22 = sshll.u32 [#allocation2], 4
      %s23 = int_to_ptr.vmem [resolvable:$true] %s22
      %28 = dma.hbm_to_vmem [thread:$0]  %s2, 4096, %s23, [#allocation3], 128, 128, 8
    $region13: #{tpu_custom_call.1} parent=1 // pred_fallthru
      _
    // Predicated region
    $region14: #{tpu_custom_call.1} parent=1 // pred_check
      _
    $region15: #{tpu_custom_call.1} parent=1 // pred_check_branch
      %30 = sbr.rel (0) target = $region17
    $region16: #{tpu_custom_call.1} parent=1 // pred_region
      %s32 = ssub.s32 4096, 4096
      %33 = vsyncadd [#allocation6], %s32
      %s34 = sshll.u32 [#allocation5], 4
      %s35 = int_to_ptr.vmem [resolvable:$true] %s34
      %40 = dma.hbm_to_vmem [thread:$0]  %s3, 4096, %s35, [#allocation6], 128, 128, 8
    $region17: #{tpu_custom_call.1} parent=1 // pred_fallthru
      _
    // Predicated region
    $region18: #{tpu_custom_call.1} parent=1 // pred_check
      _
    $region19: #{tpu_custom_call.1} parent=1 // pred_check_branch
      %42 = sbr.rel (0) target = $region21
    $region20: #{tpu_custom_call.1} parent=1 // pred_region
      _
    $region21: #{tpu_custom_call.1} parent=1 // pred_fallthru
      _
    // Predicated region
    $region22: #{tpu_custom_call.1} parent=1 // pred_check
      _
    $region23: #{tpu_custom_call.1} parent=1 // pred_check_branch
      %44 = sbr.rel (0) target = $region25
    $region24: #{tpu_custom_call.1} parent=1 // pred_region
      %45 = dma.done [#allocation3], 4096
    $region25: #{tpu_custom_call.1} parent=1 // pred_fallthru
      _
    // Predicated region
    $region26: #{tpu_custom_call.1} parent=1 // pred_check
      _
    $region27: #{tpu_custom_call.1} parent=1 // pred_check_branch
      %47 = sbr.rel (0) target = $region29
    $region28: #{tpu_custom_call.1} parent=1 // pred_region
      %48 = dma.done [#allocation6], 4096
    $region29: #{tpu_custom_call.1} parent=1 // pred_fallthru
      _
    %v49 = vld [vmem:[%s1] sm:$0xff]
    %v50 = vld [vmem:[%s1 + $0x8] sm:$0xff]
    %v51 = vld [vmem:[#allocation2] sm:$0xff]
    %v52 = vld [vmem:[#allocation2 + $0x8] sm:$0xff]
    %v53 = vld [vmem:[#allocation2 + $0x10] sm:$0xff]
    %v54 = vld [vmem:[#allocation2 + $0x18] sm:$0xff]
    %v55 = vld [vmem:[#allocation2 + $0x20] sm:$0xff]
    %v56 = vld [vmem:[#allocation2 + $0x28] sm:$0xff]
    %v57 = vld [vmem:[#allocation2 + $0x30] sm:$0xff]
    %v58 = vld [vmem:[#allocation2 + $0x38] sm:$0xff]
    %v59 = vld [vmem:[#allocation2 + $0x40] sm:$0xff]
    %v60 = vld [vmem:[#allocation2 + $0x48] sm:$0xff]
    %v61 = vld [vmem:[#allocation2 + $0x50] sm:$0xff]
    %v62 = vld [vmem:[#allocation2 + $0x58] sm:$0xff]
    %v63 = vld [vmem:[#allocation2 + $0x60] sm:$0xff]
    %v64 = vld [vmem:[#allocation2 + $0x68] sm:$0xff]
    %v65 = vld [vmem:[#allocation2 + $0x70] sm:$0xff]
    %v66 = vld [vmem:[#allocation2 + $0x78] sm:$0xff]
    %v67 = vld [vmem:[#allocation2 + $0x80] sm:$0xff]
    %v68 = vld [vmem:[#allocation2 + $0x88] sm:$0xff]
    %v69 = vld [vmem:[#allocation2 + $0x90] sm:$0xff]
    %v70 = vld [vmem:[#allocation2 + $0x98] sm:$0xff]
    %v71 = vld [vmem:[#allocation2 + $0xa0] sm:$0xff]
    %v72 = vld [vmem:[#allocation2 + $0xa8] sm:$0xff]
    %v73 = vld [vmem:[#allocation2 + $0xb0] sm:$0xff]
    %v74 = vld [vmem:[#allocation2 + $0xb8] sm:$0xff]
    %v75 = vld [vmem:[#allocation2 + $0xc0] sm:$0xff]
    %v76 = vld [vmem:[#allocation2 + $0xc8] sm:$0xff]
    %v77 = vld [vmem:[#allocation2 + $0xd0] sm:$0xff]
    %v78 = vld [vmem:[#allocation2 + $0xd8] sm:$0xff]
    %v79 = vld [vmem:[#allocation2 + $0xe0] sm:$0xff]
    %v80 = vld [vmem:[#allocation2 + $0xe8] sm:$0xff]
    %v81 = vld [vmem:[#allocation2 + $0xf0] sm:$0xff]
    %v82 = vld [vmem:[#allocation2 + $0xf8] sm:$0xff]
    %v85 = vunpack.c.l.b16 %v49
    %v86 = vunpack.c.h.b16 %v49
    %v87 = vunpack.c.l.b16 %v50
    %v88 = vunpack.c.h.b16 %v50
    %v89 = vpack.c.b16 %v87, %v85
    %v90 = vpack.c.b16 %v88, %v86
    %v125 = vunpack.c.l.b16 %v51
    %v126 = vunpack.c.h.b16 %v51
    %v127 = vunpack.c.l.b16 %v52
    %v128 = vunpack.c.h.b16 %v52
    %v129 = vunpack.c.l.b16 %v53
    %v130 = vunpack.c.h.b16 %v53
    %v131 = vunpack.c.l.b16 %v54
    %v132 = vunpack.c.h.b16 %v54
    %v133 = vunpack.c.l.b16 %v55
    %v134 = vunpack.c.h.b16 %v55
    %v135 = vunpack.c.l.b16 %v56
    %v136 = vunpack.c.h.b16 %v56
    %v137 = vunpack.c.l.b16 %v57
    %v138 = vunpack.c.h.b16 %v57
    %v139 = vunpack.c.l.b16 %v58
    %v140 = vunpack.c.h.b16 %v58
    %v141 = vunpack.c.l.b16 %v59
    %v142 = vunpack.c.h.b16 %v59
    %v143 = vunpack.c.l.b16 %v60
    %v144 = vunpack.c.h.b16 %v60
    %v145 = vunpack.c.l.b16 %v61
    %v146 = vunpack.c.h.b16 %v61
    %v147 = vunpack.c.l.b16 %v62
    %v148 = vunpack.c.h.b16 %v62
    %v149 = vunpack.c.l.b16 %v63
    %v150 = vunpack.c.h.b16 %v63
    %v151 = vunpack.c.l.b16 %v64
    %v152 = vunpack.c.h.b16 %v64
    %v153 = vunpack.c.l.b16 %v65
    %v154 = vunpack.c.h.b16 %v65
    %v155 = vunpack.c.l.b16 %v66
    %v156 = vunpack.c.h.b16 %v66
    %v157 = vunpack.c.l.b16 %v67
    %v158 = vunpack.c.h.b16 %v67
    %v159 = vunpack.c.l.b16 %v68
    %v160 = vunpack.c.h.b16 %v68
    %v161 = vunpack.c.l.b16 %v69
    %v162 = vunpack.c.h.b16 %v69
    %v163 = vunpack.c.l.b16 %v70
    %v164 = vunpack.c.h.b16 %v70
    %v165 = vunpack.c.l.b16 %v71
    %v166 = vunpack.c.h.b16 %v71
    %v167 = vunpack.c.l.b16 %v72
    %v168 = vunpack.c.h.b16 %v72
    %v169 = vunpack.c.l.b16 %v73
    %v170 = vunpack.c.h.b16 %v73
    %v171 = vunpack.c.l.b16 %v74
    %v172 = vunpack.c.h.b16 %v74
    %v173 = vunpack.c.l.b16 %v75
    %v174 = vunpack.c.h.b16 %v75
    %v175 = vunpack.c.l.b16 %v76
    %v176 = vunpack.c.h.b16 %v76
    %v177 = vunpack.c.l.b16 %v77
    %v178 = vunpack.c.h.b16 %v77
    %v179 = vunpack.c.l.b16 %v78
    %v180 = vunpack.c.h.b16 %v78
    %v181 = vunpack.c.l.b16 %v79
    %v182 = vunpack.c.h.b16 %v79
    %v183 = vunpack.c.l.b16 %v80
    %v184 = vunpack.c.h.b16 %v80
    %v185 = vunpack.c.l.b16 %v81
    %v186 = vunpack.c.h.b16 %v81
    %v187 = vunpack.c.l.b16 %v82
    %v188 = vunpack.c.h.b16 %v82
    %v189 = vpack.c.b16 %v127, %v125
    %v190 = vpack.c.b16 %v128, %v126
    %v191 = vpack.c.b16 %v131, %v129
    %v192 = vpack.c.b16 %v132, %v130
    %v193 = vpack.c.b16 %v135, %v133
    %v194 = vpack.c.b16 %v136, %v134
    %v195 = vpack.c.b16 %v139, %v137
    %v196 = vpack.c.b16 %v140, %v138
    %v197 = vpack.c.b16 %v143, %v141
    %v198 = vpack.c.b16 %v144, %v142
    %v199 = vpack.c.b16 %v147, %v145
    %v200 = vpack.c.b16 %v148, %v146
    %v201 = vpack.c.b16 %v151, %v149
    %v202 = vpack.c.b16 %v152, %v150
    %v203 = vpack.c.b16 %v155, %v153
    %v204 = vpack.c.b16 %v156, %v154
    %v205 = vpack.c.b16 %v159, %v157
    %v206 = vpack.c.b16 %v160, %v158
    %v207 = vpack.c.b16 %v163, %v161
    %v208 = vpack.c.b16 %v164, %v162
    %v209 = vpack.c.b16 %v167, %v165
    %v210 = vpack.c.b16 %v168, %v166
    %v211 = vpack.c.b16 %v171, %v169
    %v212 = vpack.c.b16 %v172, %v170
    %v213 = vpack.c.b16 %v175, %v173
    %v214 = vpack.c.b16 %v176, %v174
    %v215 = vpack.c.b16 %v179, %v177
    %v216 = vpack.c.b16 %v180, %v178
    %v217 = vpack.c.b16 %v183, %v181
    %v218 = vpack.c.b16 %v184, %v182
    %v219 = vpack.c.b16 %v187, %v185
    %v220 = vpack.c.b16 %v188, %v186
    %253 = vmatprep.subr.bf16.mxu0 %v204
    %254 = vmatpush1.bf16.msra.mxu0 %v203
    %255 = vmatprep.subr.bf16.mxu0 %v202
    %256 = vmatpush1.bf16.msra.mxu0 %v201
    %257 = vmatprep.subr.bf16.mxu0 %v200
    %258 = vmatpush1.bf16.msra.mxu0 %v199
    %259 = vmatprep.subr.bf16.mxu0 %v198
    %260 = vmatpush1.bf16.msra.mxu0 %v197
    %261 = vmatprep.subr.bf16.mxu0 %v196
    %262 = vmatpush1.bf16.msra.mxu0 %v195
    %263 = vmatprep.subr.bf16.mxu0 %v194
    %264 = vmatpush1.bf16.msra.mxu0 %v193
    %265 = vmatprep.subr.bf16.mxu0 %v192
    %266 = vmatpush1.bf16.msra.mxu0 %v191
    %267 = vmatprep.subr.bf16.mxu0 %v190
    %268 = vmatpush1.bf16.msra.mxu0 %v189
    %269 = vmatprep.subr.bf16.mxu0 %v220
    %270 = vmatpush2.bf16.msra.mxu0 %v219
    %271 = vmatprep.subr.bf16.mxu0 %v218
    %272 = vmatpush2.bf16.msra.mxu0 %v217
    %273 = vmatprep.subr.bf16.mxu0 %v216
    %274 = vmatpush2.bf16.msra.mxu0 %v215
    %275 = vmatprep.subr.bf16.mxu0 %v214
    %276 = vmatpush2.bf16.msra.mxu0 %v213
    %277 = vmatprep.subr.bf16.mxu0 %v212
    %278 = vmatpush2.bf16.msra.mxu0 %v211
    %279 = vmatprep.subr.bf16.mxu0 %v210
    %280 = vmatpush2.bf16.msra.mxu0 %v209
    %281 = vmatprep.subr.bf16.mxu0 %v208
    %282 = vmatpush2.bf16.msra.mxu0 %v207
    %283 = vmatprep.subr.bf16.mxu0 %v206
    %284 = vmatpush2.bf16.msra.mxu0 %v205
    %285 = vmatprep.mubr.bf16.mxu0 %v90
    %286 = vmatmul.mubr.bf16.gmra.mxu0 %v89
    %v287 = vpop.f32.mrf.mxu0
    %v288 = vadd.f32 0.0, %v287
    %v289 = vpop.f32.mrf.mxu0
    %v290 = vadd.f32 0.0, %v289
    %v291 = vpop.f32.mrf.mxu0
    %v292 = vadd.f32 0.0, %v291
    %v293 = vpop.f32.mrf.mxu0
    %v294 = vadd.f32 0.0, %v293
    %295 = vdwg.mxu0
    %v296 = vld [vmem:[%s0] sm:$0xff]
    %v297 = vld [vmem:[%s0 + $0x8] sm:$0xff]
    %v298 = vld [vmem:[%s0 + $0x10] sm:$0xff]
    %v299 = vld [vmem:[%s0 + $0x18] sm:$0xff]
    %v300 = vld [vmem:[%s0 + $0x20] sm:$0xff]
    %v301 = vld [vmem:[%s0 + $0x28] sm:$0xff]
    %v302 = vld [vmem:[%s0 + $0x30] sm:$0xff]
    %v303 = vld [vmem:[%s0 + $0x38] sm:$0xff]
    %v304 = vld [vmem:[%s0 + $0x40] sm:$0xff]
    %v305 = vld [vmem:[%s0 + $0x48] sm:$0xff]
    %v306 = vld [vmem:[%s0 + $0x50] sm:$0xff]
    %v307 = vld [vmem:[%s0 + $0x58] sm:$0xff]
    %v308 = vld [vmem:[%s0 + $0x60] sm:$0xff]
    %v309 = vld [vmem:[%s0 + $0x68] sm:$0xff]
    %v310 = vld [vmem:[%s0 + $0x70] sm:$0xff]
    %v311 = vld [vmem:[%s0 + $0x78] sm:$0xff]
    %v314 = vcombine.high %v288, %v288
    %v316 = vunpack.c.l.s4 1966171168
    %v317 = vunpack.c.0.s8 %v316
    %v318 = vlaneseq
    %v319 = vshrl.u32 %v318, 7
    %v320 = vsub.s32 %v317, %v319
    %v321 = vrot.slane %v288, %v320
    %v323 = vunpack.c.l.s4 1966171168
    %v324 = vunpack.c.0.s8 %v323
    %v325 = vlaneseq
    %v326 = vshrl.u32 %v325, 7
    %v327 = vsub.s32 %v324, %v326
    %v328 = vrot.slane %v314, %v327
    %v329 = vcombine.high %v321, %v321
    %v330 = vcombine.high %v328, %v328
    %v332 = vunpack.c.l.s4 1966171168
    %v333 = vunpack.c.0.s8 %v332
    %v334 = vlaneseq
    %v335 = vshrl.u32 %v334, 7
    %v336 = vsub.s32 %v333, %v335
    %v337 = vrot.slane %v321, %v336
    %v339 = vunpack.c.l.s4 1966171168
    %v340 = vunpack.c.0.s8 %v339
    %v341 = vlaneseq
    %v342 = vshrl.u32 %v341, 7
    %v343 = vsub.s32 %v340, %v342
    %v344 = vrot.slane %v328, %v343
    %v346 = vunpack.c.l.s4 1966171168
    %v347 = vunpack.c.0.s8 %v346
    %v348 = vlaneseq
    %v349 = vshrl.u32 %v348, 7
    %v350 = vsub.s32 %v347, %v349
    %v351 = vrot.slane %v329, %v350
    %v353 = vunpack.c.l.s4 1966171168
    %v354 = vunpack.c.0.s8 %v353
    %v355 = vlaneseq
    %v356 = vshrl.u32 %v355, 7
    %v357 = vsub.s32 %v354, %v356
    %v358 = vrot.slane %v330, %v357
    %v359 = vcombine.high %v337, %v337
    %v360 = vcombine.high %v344, %v344
    %v361 = vcombine.high %v351, %v351
    %v362 = vcombine.high %v358, %v358
    %v363 = vcombine.high %v292, %v292
    %v365 = vunpack.c.l.s4 1966171168
    %v366 = vunpack.c.0.s8 %v365
    %v367 = vlaneseq
    %v368 = vshrl.u32 %v367, 7
    %v369 = vsub.s32 %v366, %v368
    %v370 = vrot.slane %v292, %v369
    %v372 = vunpack.c.l.s4 1966171168
    %v373 = vunpack.c.0.s8 %v372
    %v374 = vlaneseq
    %v375 = vshrl.u32 %v374, 7
    %v376 = vsub.s32 %v373, %v375
    %v377 = vrot.slane %v363, %v376
    %v378 = vcombine.high %v370, %v370
    %v379 = vcombine.high %v377, %v377
    %v381 = vunpack.c.l.s4 1966171168
    %v382 = vunpack.c.0.s8 %v381
    %v383 = vlaneseq
    %v384 = vshrl.u32 %v383, 7
    %v385 = vsub.s32 %v382, %v384
    %v386 = vrot.slane %v370, %v385
    %v388 = vunpack.c.l.s4 1966171168
    %v389 = vunpack.c.0.s8 %v388
    %v390 = vlaneseq
    %v391 = vshrl.u32 %v390, 7
    %v392 = vsub.s32 %v389, %v391
    %v393 = vrot.slane %v377, %v392
    %v395 = vunpack.c.l.s4 1966171168
    %v396 = vunpack.c.0.s8 %v395
    %v397 = vlaneseq
    %v398 = vshrl.u32 %v397, 7
    %v399 = vsub.s32 %v396, %v398
    %v400 = vrot.slane %v378, %v399
    %v402 = vunpack.c.l.s4 1966171168
    %v403 = vunpack.c.0.s8 %v402
    %v404 = vlaneseq
    %v405 = vshrl.u32 %v404, 7
    %v406 = vsub.s32 %v403, %v405
    %v407 = vrot.slane %v379, %v406
    %v408 = vcombine.high %v386, %v386
    %v409 = vcombine.high %v393, %v393
    %v410 = vcombine.high %v400, %v400
    %v411 = vcombine.high %v407, %v407
    %413 = vset.pattern.permute.xlu0 0
    %414 = vperm.xlu0 %413, %v296
    %v415 = vpop.permute.xlu0 %414
    %418 = vset.pattern.permute.xlu0 0
    %419 = vperm.xlu0 %418, %v297
    %v420 = vpop.permute.xlu0 %419
    %423 = vset.pattern.permute.xlu0 0
    %424 = vperm.xlu0 %423, %v298
    %v425 = vpop.permute.xlu0 %424
    %428 = vset.pattern.permute.xlu0 0
    %429 = vperm.xlu0 %428, %v299
    %v430 = vpop.permute.xlu0 %429
    %433 = vset.pattern.permute.xlu0 0
    %434 = vperm.xlu0 %433, %v300
    %v435 = vpop.permute.xlu0 %434
    %438 = vset.pattern.permute.xlu0 0
    %439 = vperm.xlu0 %438, %v301
    %v440 = vpop.permute.xlu0 %439
    %443 = vset.pattern.permute.xlu0 0
    %444 = vperm.xlu0 %443, %v302
    %v445 = vpop.permute.xlu0 %444
    %448 = vset.pattern.permute.xlu0 0
    %449 = vperm.xlu0 %448, %v303
    %v450 = vpop.permute.xlu0 %449
    %453 = vset.pattern.permute.xlu0 0
    %454 = vperm.xlu0 %453, %v304
    %v455 = vpop.permute.xlu0 %454
    %458 = vset.pattern.permute.xlu0 0
    %459 = vperm.xlu0 %458, %v305
    %v460 = vpop.permute.xlu0 %459
    %463 = vset.pattern.permute.xlu0 0
    %464 = vperm.xlu0 %463, %v306
    %v465 = vpop.permute.xlu0 %464
    %468 = vset.pattern.permute.xlu0 0
    %469 = vperm.xlu0 %468, %v307
    %v470 = vpop.permute.xlu0 %469
    %473 = vset.pattern.permute.xlu0 0
    %474 = vperm.xlu0 %473, %v308
    %v475 = vpop.permute.xlu0 %474
    %478 = vset.pattern.permute.xlu0 0
    %479 = vperm.xlu0 %478, %v309
    %v480 = vpop.permute.xlu0 %479
    %483 = vset.pattern.permute.xlu0 0
    %484 = vperm.xlu0 %483, %v310
    %v485 = vpop.permute.xlu0 %484
    %488 = vset.pattern.permute.xlu0 0
    %489 = vperm.xlu0 %488, %v311
    %v490 = vpop.permute.xlu0 %489
    %v492 = vlaneseq
    %v493 = vshrl.u32 %v492, 7
    %v494 = vsub.s32 0, %v493
    %v495 = vrot.slane %v337, %v494
    %v496 = vlaneseq
    %v497 = vshrl.u32 %v496, 7
    %v498 = vsub.s32 0, %v497
    %v499 = vrot.slane %v351, %v498
    %v500 = vlaneseq
    %v501 = vshrl.u32 %v500, 7
    %v502 = vsub.s32 0, %v501
    %v503 = vrot.slane %v359, %v502
    %v504 = vlaneseq
    %v505 = vshrl.u32 %v504, 7
    %v506 = vsub.s32 0, %v505
    %v507 = vrot.slane %v361, %v506
    %v508 = vlaneseq
    %v509 = vshrl.u32 %v508, 7
    %v510 = vsub.s32 0, %v509
    %v511 = vrot.slane %v344, %v510
    %v512 = vlaneseq
    %v513 = vshrl.u32 %v512, 7
    %v514 = vsub.s32 0, %v513
    %v515 = vrot.slane %v358, %v514
    %v516 = vlaneseq
    %v517 = vshrl.u32 %v516, 7
    %v518 = vsub.s32 0, %v517
    %v519 = vrot.slane %v360, %v518
    %v520 = vlaneseq
    %v521 = vshrl.u32 %v520, 7
    %v522 = vsub.s32 0, %v521
    %v523 = vrot.slane %v362, %v522
    %v524 = vlaneseq
    %v525 = vshrl.u32 %v524, 7
    %v526 = vsub.s32 0, %v525
    %v527 = vrot.slane %v386, %v526
    %v528 = vlaneseq
    %v529 = vshrl.u32 %v528, 7
    %v530 = vsub.s32 0, %v529
    %v531 = vrot.slane %v400, %v530
    %v532 = vlaneseq
    %v533 = vshrl.u32 %v532, 7
    %v534 = vsub.s32 0, %v533
    %v535 = vrot.slane %v408, %v534
    %v536 = vlaneseq
    %v537 = vshrl.u32 %v536, 7
    %v538 = vsub.s32 0, %v537
    %v539 = vrot.slane %v410, %v538
    %v540 = vlaneseq
    %v541 = vshrl.u32 %v540, 7
    %v542 = vsub.s32 0, %v541
    %v543 = vrot.slane %v393, %v542
    %v544 = vlaneseq
    %v545 = vshrl.u32 %v544, 7
    %v546 = vsub.s32 0, %v545
    %v547 = vrot.slane %v407, %v546
    %v548 = vlaneseq
    %v549 = vshrl.u32 %v548, 7
    %v550 = vsub.s32 0, %v549
    %v551 = vrot.slane %v409, %v550
    %v552 = vlaneseq
    %v553 = vshrl.u32 %v552, 7
    %v554 = vsub.s32 0, %v553
    %v555 = vrot.slane %v411, %v554
    %v572 = vmul.f32 %v415, %v495
    %v573 = vmul.f32 %v420, %v499
    %v574 = vmul.f32 %v425, %v503
    %v575 = vmul.f32 %v430, %v507
    %v576 = vmul.f32 %v435, %v511
    %v577 = vmul.f32 %v440, %v515
    %v578 = vmul.f32 %v445, %v519
    %v579 = vmul.f32 %v450, %v523
    %v580 = vmul.f32 %v455, %v527
    %v581 = vmul.f32 %v460, %v531
    %v582 = vmul.f32 %v465, %v535
    %v583 = vmul.f32 %v470, %v539
    %v584 = vmul.f32 %v475, %v543
    %v585 = vmul.f32 %v480, %v547
    %v586 = vmul.f32 %v485, %v551
    %v587 = vmul.f32 %v490, %v555
    %588 = vset.pattern.permute.xlu0 1
    %589 = vperm.xlu0 %588, %v296
    %v590 = vpop.permute.xlu0 %589
    %592 = vset.pattern.permute.xlu0 1
    %593 = vperm.xlu0 %592, %v297
    %v594 = vpop.permute.xlu0 %593
    %596 = vset.pattern.permute.xlu0 1
    %597 = vperm.xlu0 %596, %v298
    %v598 = vpop.permute.xlu0 %597
    %600 = vset.pattern.permute.xlu0 1
    %601 = vperm.xlu0 %600, %v299
    %v602 = vpop.permute.xlu0 %601
    %604 = vset.pattern.permute.xlu0 1
    %605 = vperm.xlu0 %604, %v300
    %v606 = vpop.permute.xlu0 %605
    %608 = vset.pattern.permute.xlu0 1
    %609 = vperm.xlu0 %608, %v301
    %v610 = vpop.permute.xlu0 %609
    %612 = vset.pattern.permute.xlu0 1
    %613 = vperm.xlu0 %612, %v302
    %v614 = vpop.permute.xlu0 %613
    %616 = vset.pattern.permute.xlu0 1
    %617 = vperm.xlu0 %616, %v303
    %v618 = vpop.permute.xlu0 %617
    %620 = vset.pattern.permute.xlu0 1
    %621 = vperm.xlu0 %620, %v304
    %v622 = vpop.permute.xlu0 %621
    %624 = vset.pattern.permute.xlu0 1
    %625 = vperm.xlu0 %624, %v305
    %v626 = vpop.permute.xlu0 %625
    %628 = vset.pattern.permute.xlu0 1
    %629 = vperm.xlu0 %628, %v306
    %v630 = vpop.permute.xlu0 %629
    %632 = vset.pattern.permute.xlu0 1
    %633 = vperm.xlu0 %632, %v307
    %v634 = vpop.permute.xlu0 %633
    %636 = vset.pattern.permute.xlu0 1
    %637 = vperm.xlu0 %636, %v308
    %v638 = vpop.permute.xlu0 %637
    %640 = vset.pattern.permute.xlu0 1
    %641 = vperm.xlu0 %640, %v309
    %v642 = vpop.permute.xlu0 %641
    %644 = vset.pattern.permute.xlu0 1
    %645 = vperm.xlu0 %644, %v310
    %v646 = vpop.permute.xlu0 %645
    %648 = vset.pattern.permute.xlu0 1
    %649 = vperm.xlu0 %648, %v311
    %v650 = vpop.permute.xlu0 %649
    %v652 = vmul.f32 %v590, %v495
    %v653 = vmul.f32 %v594, %v499
    %v654 = vmul.f32 %v598, %v503
    %v655 = vmul.f32 %v602, %v507
    %v656 = vmul.f32 %v606, %v511
    %v657 = vmul.f32 %v610, %v515
    %v658 = vmul.f32 %v614, %v519
    %v659 = vmul.f32 %v618, %v523
    %v660 = vmul.f32 %v622, %v527
    %v661 = vmul.f32 %v626, %v531
    %v662 = vmul.f32 %v630, %v535
    %v663 = vmul.f32 %v634, %v539
    %v664 = vmul.f32 %v638, %v543
    %v665 = vmul.f32 %v642, %v547
    %v666 = vmul.f32 %v646, %v551
    %v667 = vmul.f32 %v650, %v555
    %684 = vrot.lane.b32.xlu0 %v652, 96
    %v685 = vpop.permute.xlu0 %684
    %686 = vrot.lane.b32.xlu0 %v653, 96
    %v687 = vpop.permute.xlu0 %686
    %688 = vrot.lane.b32.xlu0 %v654, 96
    %v689 = vpop.permute.xlu0 %688
    %690 = vrot.lane.b32.xlu0 %v655, 96
    %v691 = vpop.permute.xlu0 %690
    %692 = vrot.lane.b32.xlu0 %v656, 96
    %v693 = vpop.permute.xlu0 %692
    %694 = vrot.lane.b32.xlu0 %v657, 96
    %v695 = vpop.permute.xlu0 %694
    %696 = vrot.lane.b32.xlu0 %v658, 96
    %v697 = vpop.permute.xlu0 %696
    %698 = vrot.lane.b32.xlu0 %v659, 96
    %v699 = vpop.permute.xlu0 %698
    %700 = vrot.lane.b32.xlu0 %v660, 96
    %v701 = vpop.permute.xlu0 %700
    %702 = vrot.lane.b32.xlu0 %v661, 96
    %v703 = vpop.permute.xlu0 %702
    %704 = vrot.lane.b32.xlu0 %v662, 96
    %v705 = vpop.permute.xlu0 %704
    %706 = vrot.lane.b32.xlu0 %v663, 96
    %v707 = vpop.permute.xlu0 %706
    %708 = vrot.lane.b32.xlu0 %v664, 96
    %v709 = vpop.permute.xlu0 %708
    %710 = vrot.lane.b32.xlu0 %v665, 96
    %v711 = vpop.permute.xlu0 %710
    %712 = vrot.lane.b32.xlu0 %v666, 96
    %v713 = vpop.permute.xlu0 %712
    %714 = vrot.lane.b32.xlu0 %v667, 96
    %v715 = vpop.permute.xlu0 %714
    %v732 = vadd.f32 %v572, %v685
    %v733 = vadd.f32 %v573, %v687
    %v734 = vadd.f32 %v574, %v689
    %v735 = vadd.f32 %v575, %v691
    %v736 = vadd.f32 %v576, %v693
    %v737 = vadd.f32 %v577, %v695
    %v738 = vadd.f32 %v578, %v697
    %v739 = vadd.f32 %v579, %v699
    %v740 = vadd.f32 %v580, %v701
    %v741 = vadd.f32 %v581, %v703
    %v742 = vadd.f32 %v582, %v705
    %v743 = vadd.f32 %v583, %v707
    %v744 = vadd.f32 %v584, %v709
    %v745 = vadd.f32 %v585, %v711
    %v746 = vadd.f32 %v586, %v713
    %v747 = vadd.f32 %v587, %v715
    %748 = vset.pattern.permute.xlu0 2
    %749 = vperm.xlu0 %748, %v296
    %v750 = vpop.permute.xlu0 %749
    %752 = vset.pattern.permute.xlu0 2
    %753 = vperm.xlu0 %752, %v297
    %v754 = vpop.permute.xlu0 %753
    %756 = vset.pattern.permute.xlu0 2
    %757 = vperm.xlu0 %756, %v298
    %v758 = vpop.permute.xlu0 %757
    %760 = vset.pattern.permute.xlu0 2
    %761 = vperm.xlu0 %760, %v299
    %v762 = vpop.permute.xlu0 %761
    %764 = vset.pattern.permute.xlu0 2
    %765 = vperm.xlu0 %764, %v300
    %v766 = vpop.permute.xlu0 %765
    %768 = vset.pattern.permute.xlu0 2
    %769 = vperm.xlu0 %768, %v301
    %v770 = vpop.permute.xlu0 %769
    %772 = vset.pattern.permute.xlu0 2
    %773 = vperm.xlu0 %772, %v302
    %v774 = vpop.permute.xlu0 %773
    %776 = vset.pattern.permute.xlu0 2
    %777 = vperm.xlu0 %776, %v303
    %v778 = vpop.permute.xlu0 %777
    %780 = vset.pattern.permute.xlu0 2
    %781 = vperm.xlu0 %780, %v304
    %v782 = vpop.permute.xlu0 %781
    %784 = vset.pattern.permute.xlu0 2
    %785 = vperm.xlu0 %784, %v305
    %v786 = vpop.permute.xlu0 %785
    %788 = vset.pattern.permute.xlu0 2
    %789 = vperm.xlu0 %788, %v306
    %v790 = vpop.permute.xlu0 %789
    %792 = vset.pattern.permute.xlu0 2
    %793 = vperm.xlu0 %792, %v307
    %v794 = vpop.permute.xlu0 %793
    %796 = vset.pattern.permute.xlu0 2
    %797 = vperm.xlu0 %796, %v308
    %v798 = vpop.permute.xlu0 %797
    %800 = vset.pattern.permute.xlu0 2
    %801 = vperm.xlu0 %800, %v309
    %v802 = vpop.permute.xlu0 %801
    %804 = vset.pattern.permute.xlu0 2
    %805 = vperm.xlu0 %804, %v310
    %v806 = vpop.permute.xlu0 %805
    %808 = vset.pattern.permute.xlu0 2
    %809 = vperm.xlu0 %808, %v311
    %v810 = vpop.permute.xlu0 %809
    %v812 = vmul.f32 %v750, %v495
    %v813 = vmul.f32 %v754, %v499
    %v814 = vmul.f32 %v758, %v503
    %v815 = vmul.f32 %v762, %v507
    %v816 = vmul.f32 %v766, %v511
    %v817 = vmul.f32 %v770, %v515
    %v818 = vmul.f32 %v774, %v519
    %v819 = vmul.f32 %v778, %v523
    %v820 = vmul.f32 %v782, %v527
    %v821 = vmul.f32 %v786, %v531
    %v822 = vmul.f32 %v790, %v535
    %v823 = vmul.f32 %v794, %v539
    %v824 = vmul.f32 %v798, %v543
    %v825 = vmul.f32 %v802, %v547
    %v826 = vmul.f32 %v806, %v551
    %v827 = vmul.f32 %v810, %v555
    %844 = vrot.lane.b32.xlu0 %v812, 64
    %v845 = vpop.permute.xlu0 %844
    %846 = vrot.lane.b32.xlu0 %v813, 64
    %v847 = vpop.permute.xlu0 %846
    %848 = vrot.lane.b32.xlu0 %v814, 64
    %v849 = vpop.permute.xlu0 %848
    %850 = vrot.lane.b32.xlu0 %v815, 64
    %v851 = vpop.permute.xlu0 %850
    %852 = vrot.lane.b32.xlu0 %v816, 64
    %v853 = vpop.permute.xlu0 %852
    %854 = vrot.lane.b32.xlu0 %v817, 64
    %v855 = vpop.permute.xlu0 %854
    %856 = vrot.lane.b32.xlu0 %v818, 64
    %v857 = vpop.permute.xlu0 %856
    %858 = vrot.lane.b32.xlu0 %v819, 64
    %v859 = vpop.permute.xlu0 %858
    %860 = vrot.lane.b32.xlu0 %v820, 64
    %v861 = vpop.permute.xlu0 %860
    %862 = vrot.lane.b32.xlu0 %v821, 64
    %v863 = vpop.permute.xlu0 %862
    %864 = vrot.lane.b32.xlu0 %v822, 64
    %v865 = vpop.permute.xlu0 %864
    %866 = vrot.lane.b32.xlu0 %v823, 64
    %v867 = vpop.permute.xlu0 %866
    %868 = vrot.lane.b32.xlu0 %v824, 64
    %v869 = vpop.permute.xlu0 %868
    %870 = vrot.lane.b32.xlu0 %v825, 64
    %v871 = vpop.permute.xlu0 %870
    %872 = vrot.lane.b32.xlu0 %v826, 64
    %v873 = vpop.permute.xlu0 %872
    %874 = vrot.lane.b32.xlu0 %v827, 64
    %v875 = vpop.permute.xlu0 %874
    %v892 = vadd.f32 %v732, %v845
    %v893 = vadd.f32 %v733, %v847
    %v894 = vadd.f32 %v734, %v849
    %v895 = vadd.f32 %v735, %v851
    %v896 = vadd.f32 %v736, %v853
    %v897 = vadd.f32 %v737, %v855
    %v898 = vadd.f32 %v738, %v857
    %v899 = vadd.f32 %v739, %v859
    %v900 = vadd.f32 %v740, %v861
    %v901 = vadd.f32 %v741, %v863
    %v902 = vadd.f32 %v742, %v865
    %v903 = vadd.f32 %v743, %v867
    %v904 = vadd.f32 %v744, %v869
    %v905 = vadd.f32 %v745, %v871
    %v906 = vadd.f32 %v746, %v873
    %v907 = vadd.f32 %v747, %v875
    %908 = vset.pattern.permute.xlu0 3
    %909 = vperm.xlu0 %908, %v296
    %v910 = vpop.permute.xlu0 %909
    %912 = vset.pattern.permute.xlu0 3
    %913 = vperm.xlu0 %912, %v297
    %v914 = vpop.permute.xlu0 %913
    %916 = vset.pattern.permute.xlu0 3
    %917 = vperm.xlu0 %916, %v298
    %v918 = vpop.permute.xlu0 %917
    %920 = vset.pattern.permute.xlu0 3
    %921 = vperm.xlu0 %920, %v299
    %v922 = vpop.permute.xlu0 %921
    %924 = vset.pattern.permute.xlu0 3
    %925 = vperm.xlu0 %924, %v300
    %v926 = vpop.permute.xlu0 %925
    %928 = vset.pattern.permute.xlu0 3
    %929 = vperm.xlu0 %928, %v301
    %v930 = vpop.permute.xlu0 %929
    %932 = vset.pattern.permute.xlu0 3
    %933 = vperm.xlu0 %932, %v302
    %v934 = vpop.permute.xlu0 %933
    %936 = vset.pattern.permute.xlu0 3
    %937 = vperm.xlu0 %936, %v303
    %v938 = vpop.permute.xlu0 %937
    %940 = vset.pattern.permute.xlu0 3
    %941 = vperm.xlu0 %940, %v304
    %v942 = vpop.permute.xlu0 %941
    %944 = vset.pattern.permute.xlu0 3
    %945 = vperm.xlu0 %944, %v305
    %v946 = vpop.permute.xlu0 %945
    %948 = vset.pattern.permute.xlu0 3
    %949 = vperm.xlu0 %948, %v306
    %v950 = vpop.permute.xlu0 %949
    %952 = vset.pattern.permute.xlu0 3
    %953 = vperm.xlu0 %952, %v307
    %v954 = vpop.permute.xlu0 %953
    %956 = vset.pattern.permute.xlu0 3
    %957 = vperm.xlu0 %956, %v308
    %v958 = vpop.permute.xlu0 %957
    %960 = vset.pattern.permute.xlu0 3
    %961 = vperm.xlu0 %960, %v309
    %v962 = vpop.permute.xlu0 %961
    %964 = vset.pattern.permute.xlu0 3
    %965 = vperm.xlu0 %964, %v310
    %v966 = vpop.permute.xlu0 %965
    %968 = vset.pattern.permute.xlu0 3
    %969 = vperm.xlu0 %968, %v311
    %v970 = vpop.permute.xlu0 %969
    %v972 = vmul.f32 %v910, %v495
    %v973 = vmul.f32 %v914, %v499
    %v974 = vmul.f32 %v918, %v503
    %v975 = vmul.f32 %v922, %v507
    %v976 = vmul.f32 %v926, %v511
    %v977 = vmul.f32 %v930, %v515
    %v978 = vmul.f32 %v934, %v519
    %v979 = vmul.f32 %v938, %v523
    %v980 = vmul.f32 %v942, %v527
    %v981 = vmul.f32 %v946, %v531
    %v982 = vmul.f32 %v950, %v535
    %v983 = vmul.f32 %v954, %v539
    %v984 = vmul.f32 %v958, %v543
    %v985 = vmul.f32 %v962, %v547
    %v986 = vmul.f32 %v966, %v551
    %v987 = vmul.f32 %v970, %v555
    %1004 = vrot.lane.b32.xlu0 %v972, 32
    %v1005 = vpop.permute.xlu0 %1004
    %1006 = vrot.lane.b32.xlu0 %v973, 32
    %v1007 = vpop.permute.xlu0 %1006
    %1008 = vrot.lane.b32.xlu0 %v974, 32
    %v1009 = vpop.permute.xlu0 %1008
    %1010 = vrot.lane.b32.xlu0 %v975, 32
    %v1011 = vpop.permute.xlu0 %1010
    %1012 = vrot.lane.b32.xlu0 %v976, 32
    %v1013 = vpop.permute.xlu0 %1012
    %1014 = vrot.lane.b32.xlu0 %v977, 32
    %v1015 = vpop.permute.xlu0 %1014
    %1016 = vrot.lane.b32.xlu0 %v978, 32
    %v1017 = vpop.permute.xlu0 %1016
    %1018 = vrot.lane.b32.xlu0 %v979, 32
    %v1019 = vpop.permute.xlu0 %1018
    %1020 = vrot.lane.b32.xlu0 %v980, 32
    %v1021 = vpop.permute.xlu0 %1020
    %1022 = vrot.lane.b32.xlu0 %v981, 32
    %v1023 = vpop.permute.xlu0 %1022
    %1024 = vrot.lane.b32.xlu0 %v982, 32
    %v1025 = vpop.permute.xlu0 %1024
    %1026 = vrot.lane.b32.xlu0 %v983, 32
    %v1027 = vpop.permute.xlu0 %1026
    %1028 = vrot.lane.b32.xlu0 %v984, 32
    %v1029 = vpop.permute.xlu0 %1028
    %1030 = vrot.lane.b32.xlu0 %v985, 32
    %v1031 = vpop.permute.xlu0 %1030
    %1032 = vrot.lane.b32.xlu0 %v986, 32
    %v1033 = vpop.permute.xlu0 %1032
    %1034 = vrot.lane.b32.xlu0 %v987, 32
    %v1035 = vpop.permute.xlu0 %1034
    %v1052 = vadd.f32 %v892, %v1005
    %v1053 = vadd.f32 %v893, %v1007
    %v1054 = vadd.f32 %v894, %v1009
    %v1055 = vadd.f32 %v895, %v1011
    %v1056 = vadd.f32 %v896, %v1013
    %v1057 = vadd.f32 %v897, %v1015
    %v1058 = vadd.f32 %v898, %v1017
    %v1059 = vadd.f32 %v899, %v1019
    %v1060 = vadd.f32 %v900, %v1021
    %v1061 = vadd.f32 %v901, %v1023
    %v1062 = vadd.f32 %v902, %v1025
    %v1063 = vadd.f32 %v903, %v1027
    %v1064 = vadd.f32 %v904, %v1029
    %v1065 = vadd.f32 %v905, %v1031
    %v1066 = vadd.f32 %v906, %v1033
    %v1067 = vadd.f32 %v907, %v1035
    %v1070 = vcombine.high %v290, %v290
    %v1072 = vunpack.c.l.s4 1966171168
    %v1073 = vunpack.c.0.s8 %v1072
    %v1074 = vlaneseq
    %v1075 = vshrl.u32 %v1074, 7
    %v1076 = vsub.s32 %v1073, %v1075
    %v1077 = vrot.slane %v290, %v1076
    %v1079 = vunpack.c.l.s4 1966171168
    %v1080 = vunpack.c.0.s8 %v1079
    %v1081 = vlaneseq
    %v1082 = vshrl.u32 %v1081, 7
    %v1083 = vsub.s32 %v1080, %v1082
    %v1084 = vrot.slane %v1070, %v1083
    %v1085 = vcombine.high %v1077, %v1077
    %v1086 = vcombine.high %v1084, %v1084
    %v1088 = vunpack.c.l.s4 1966171168
    %v1089 = vunpack.c.0.s8 %v1088
    %v1090 = vlaneseq
    %v1091 = vshrl.u32 %v1090, 7
    %v1092 = vsub.s32 %v1089, %v1091
    %v1093 = vrot.slane %v1077, %v1092
    %v1095 = vunpack.c.l.s4 1966171168
    %v1096 = vunpack.c.0.s8 %v1095
    %v1097 = vlaneseq
    %v1098 = vshrl.u32 %v1097, 7
    %v1099 = vsub.s32 %v1096, %v1098
    %v1100 = vrot.slane %v1084, %v1099
    %v1102 = vunpack.c.l.s4 1966171168
    %v1103 = vunpack.c.0.s8 %v1102
    %v1104 = vlaneseq
    %v1105 = vshrl.u32 %v1104, 7
    %v1106 = vsub.s32 %v1103, %v1105
    %v1107 = vrot.slane %v1085, %v1106
    %v1109 = vunpack.c.l.s4 1966171168
    %v1110 = vunpack.c.0.s8 %v1109
    %v1111 = vlaneseq
    %v1112 = vshrl.u32 %v1111, 7
    %v1113 = vsub.s32 %v1110, %v1112
    %v1114 = vrot.slane %v1086, %v1113
    %v1115 = vcombine.high %v1093, %v1093
    %v1116 = vcombine.high %v1100, %v1100
    %v1117 = vcombine.high %v1107, %v1107
    %v1118 = vcombine.high %v1114, %v1114
    %v1119 = vcombine.high %v294, %v294
    %v1121 = vunpack.c.l.s4 1966171168
    %v1122 = vunpack.c.0.s8 %v1121
    %v1123 = vlaneseq
    %v1124 = vshrl.u32 %v1123, 7
    %v1125 = vsub.s32 %v1122, %v1124
    %v1126 = vrot.slane %v294, %v1125
    %v1128 = vunpack.c.l.s4 1966171168
    %v1129 = vunpack.c.0.s8 %v1128
    %v1130 = vlaneseq
    %v1131 = vshrl.u32 %v1130, 7
    %v1132 = vsub.s32 %v1129, %v1131
    %v1133 = vrot.slane %v1119, %v1132
    %v1134 = vcombine.high %v1126, %v1126
    %v1135 = vcombine.high %v1133, %v1133
    %v1137 = vunpack.c.l.s4 1966171168
    %v1138 = vunpack.c.0.s8 %v1137
    %v1139 = vlaneseq
    %v1140 = vshrl.u32 %v1139, 7
    %v1141 = vsub.s32 %v1138, %v1140
    %v1142 = vrot.slane %v1126, %v1141
    %v1144 = vunpack.c.l.s4 1966171168
    %v1145 = vunpack.c.0.s8 %v1144
    %v1146 = vlaneseq
    %v1147 = vshrl.u32 %v1146, 7
    %v1148 = vsub.s32 %v1145, %v1147
    %v1149 = vrot.slane %v1133, %v1148
    %v1151 = vunpack.c.l.s4 1966171168
    %v1152 = vunpack.c.0.s8 %v1151
    %v1153 = vlaneseq
    %v1154 = vshrl.u32 %v1153, 7
    %v1155 = vsub.s32 %v1152, %v1154
    %v1156 = vrot.slane %v1134, %v1155
    %v1158 = vunpack.c.l.s4 1966171168
    %v1159 = vunpack.c.0.s8 %v1158
    %v1160 = vlaneseq
    %v1161 = vshrl.u32 %v1160, 7
    %v1162 = vsub.s32 %v1159, %v1161
    %v1163 = vrot.slane %v1135, %v1162
    %v1164 = vcombine.high %v1142, %v1142
    %v1165 = vcombine.high %v1149, %v1149
    %v1166 = vcombine.high %v1156, %v1156
    %v1167 = vcombine.high %v1163, %v1163
    %1168 = vset.pattern.permute.xlu0 4
    %1169 = vperm.xlu0 %1168, %v296
    %v1170 = vpop.permute.xlu0 %1169
    %1172 = vset.pattern.permute.xlu0 4
    %1173 = vperm.xlu0 %1172, %v297
    %v1174 = vpop.permute.xlu0 %1173
    %1176 = vset.pattern.permute.xlu0 4
    %1177 = vperm.xlu0 %1176, %v298
    %v1178 = vpop.permute.xlu0 %1177
    %1180 = vset.pattern.permute.xlu0 4
    %1181 = vperm.xlu0 %1180, %v299
    %v1182 = vpop.permute.xlu0 %1181
    %1184 = vset.pattern.permute.xlu0 4
    %1185 = vperm.xlu0 %1184, %v300
    %v1186 = vpop.permute.xlu0 %1185
    %1188 = vset.pattern.permute.xlu0 4
    %1189 = vperm.xlu0 %1188, %v301
    %v1190 = vpop.permute.xlu0 %1189
    %1192 = vset.pattern.permute.xlu0 4
    %1193 = vperm.xlu0 %1192, %v302
    %v1194 = vpop.permute.xlu0 %1193
    %1196 = vset.pattern.permute.xlu0 4
    %1197 = vperm.xlu0 %1196, %v303
    %v1198 = vpop.permute.xlu0 %1197
    %1200 = vset.pattern.permute.xlu0 4
    %1201 = vperm.xlu0 %1200, %v304
    %v1202 = vpop.permute.xlu0 %1201
    %1204 = vset.pattern.permute.xlu0 4
    %1205 = vperm.xlu0 %1204, %v305
    %v1206 = vpop.permute.xlu0 %1205
    %1208 = vset.pattern.permute.xlu0 4
    %1209 = vperm.xlu0 %1208, %v306
    %v1210 = vpop.permute.xlu0 %1209
    %1212 = vset.pattern.permute.xlu0 4
    %1213 = vperm.xlu0 %1212, %v307
    %v1214 = vpop.permute.xlu0 %1213
    %1216 = vset.pattern.permute.xlu0 4
    %1217 = vperm.xlu0 %1216, %v308
    %v1218 = vpop.permute.xlu0 %1217
    %1220 = vset.pattern.permute.xlu0 4
    %1221 = vperm.xlu0 %1220, %v309
    %v1222 = vpop.permute.xlu0 %1221
    %1224 = vset.pattern.permute.xlu0 4
    %1225 = vperm.xlu0 %1224, %v310
    %v1226 = vpop.permute.xlu0 %1225
    %1228 = vset.pattern.permute.xlu0 4
    %1229 = vperm.xlu0 %1228, %v311
    %v1230 = vpop.permute.xlu0 %1229
    %v1232 = vlaneseq
    %v1233 = vshrl.u32 %v1232, 7
    %v1234 = vsub.s32 0, %v1233
    %v1235 = vrot.slane %v1093, %v1234
    %v1236 = vlaneseq
    %v1237 = vshrl.u32 %v1236, 7
    %v1238 = vsub.s32 0, %v1237
    %v1239 = vrot.slane %v1107, %v1238
    %v1240 = vlaneseq
    %v1241 = vshrl.u32 %v1240, 7
    %v1242 = vsub.s32 0, %v1241
    %v1243 = vrot.slane %v1115, %v1242
    %v1244 = vlaneseq
    %v1245 = vshrl.u32 %v1244, 7
    %v1246 = vsub.s32 0, %v1245
    %v1247 = vrot.slane %v1117, %v1246
    %v1248 = vlaneseq
    %v1249 = vshrl.u32 %v1248, 7
    %v1250 = vsub.s32 0, %v1249
    %v1251 = vrot.slane %v1100, %v1250
    %v1252 = vlaneseq
    %v1253 = vshrl.u32 %v1252, 7
    %v1254 = vsub.s32 0, %v1253
    %v1255 = vrot.slane %v1114, %v1254
    %v1256 = vlaneseq
    %v1257 = vshrl.u32 %v1256, 7
    %v1258 = vsub.s32 0, %v1257
    %v1259 = vrot.slane %v1116, %v1258
    %v1260 = vlaneseq
    %v1261 = vshrl.u32 %v1260, 7
    %v1262 = vsub.s32 0, %v1261
    %v1263 = vrot.slane %v1118, %v1262
    %v1264 = vlaneseq
    %v1265 = vshrl.u32 %v1264, 7
    %v1266 = vsub.s32 0, %v1265
    %v1267 = vrot.slane %v1142, %v1266
    %v1268 = vlaneseq
    %v1269 = vshrl.u32 %v1268, 7
    %v1270 = vsub.s32 0, %v1269
    %v1271 = vrot.slane %v1156, %v1270
    %v1272 = vlaneseq
    %v1273 = vshrl.u32 %v1272, 7
    %v1274 = vsub.s32 0, %v1273
    %v1275 = vrot.slane %v1164, %v1274
    %v1276 = vlaneseq
    %v1277 = vshrl.u32 %v1276, 7
    %v1278 = vsub.s32 0, %v1277
    %v1279 = vrot.slane %v1166, %v1278
    %v1280 = vlaneseq
    %v1281 = vshrl.u32 %v1280, 7
    %v1282 = vsub.s32 0, %v1281
    %v1283 = vrot.slane %v1149, %v1282
    %v1284 = vlaneseq
    %v1285 = vshrl.u32 %v1284, 7
    %v1286 = vsub.s32 0, %v1285
    %v1287 = vrot.slane %v1163, %v1286
    %v1288 = vlaneseq
    %v1289 = vshrl.u32 %v1288, 7
    %v1290 = vsub.s32 0, %v1289
    %v1291 = vrot.slane %v1165, %v1290
    %v1292 = vlaneseq
    %v1293 = vshrl.u32 %v1292, 7
    %v1294 = vsub.s32 0, %v1293
    %v1295 = vrot.slane %v1167, %v1294
    %v1312 = vmul.f32 %v1170, %v1235
    %v1313 = vmul.f32 %v1174, %v1239
    %v1314 = vmul.f32 %v1178, %v1243
    %v1315 = vmul.f32 %v1182, %v1247
    %v1316 = vmul.f32 %v1186, %v1251
    %v1317 = vmul.f32 %v1190, %v1255
    %v1318 = vmul.f32 %v1194, %v1259
    %v1319 = vmul.f32 %v1198, %v1263
    %v1320 = vmul.f32 %v1202, %v1267
    %v1321 = vmul.f32 %v1206, %v1271
    %v1322 = vmul.f32 %v1210, %v1275
    %v1323 = vmul.f32 %v1214, %v1279
    %v1324 = vmul.f32 %v1218, %v1283
    %v1325 = vmul.f32 %v1222, %v1287
    %v1326 = vmul.f32 %v1226, %v1291
    %v1327 = vmul.f32 %v1230, %v1295
    %v1328 = vadd.f32 %v1052, %v1312
    %v1329 = vadd.f32 %v1053, %v1313
    %v1330 = vadd.f32 %v1054, %v1314
    %v1331 = vadd.f32 %v1055, %v1315
    %v1332 = vadd.f32 %v1056, %v1316
    %v1333 = vadd.f32 %v1057, %v1317
    %v1334 = vadd.f32 %v1058, %v1318
    %v1335 = vadd.f32 %v1059, %v1319
    %v1336 = vadd.f32 %v1060, %v1320
    %v1337 = vadd.f32 %v1061, %v1321
    %v1338 = vadd.f32 %v1062, %v1322
    %v1339 = vadd.f32 %v1063, %v1323
    %v1340 = vadd.f32 %v1064, %v1324
    %v1341 = vadd.f32 %v1065, %v1325
    %v1342 = vadd.f32 %v1066, %v1326
    %v1343 = vadd.f32 %v1067, %v1327
    %1344 = vset.pattern.permute.xlu0 5
    %1345 = vperm.xlu0 %1344, %v296
    %v1346 = vpop.permute.xlu0 %1345
    %1348 = vset.pattern.permute.xlu0 5
    %1349 = vperm.xlu0 %1348, %v297
    %v1350 = vpop.permute.xlu0 %1349
    %1352 = vset.pattern.permute.xlu0 5
    %1353 = vperm.xlu0 %1352, %v298
    %v1354 = vpop.permute.xlu0 %1353
    %1356 = vset.pattern.permute.xlu0 5
    %1357 = vperm.xlu0 %1356, %v299
    %v1358 = vpop.permute.xlu0 %1357
    %1360 = vset.pattern.permute.xlu0 5
    %1361 = vperm.xlu0 %1360, %v300
    %v1362 = vpop.permute.xlu0 %1361
    %1364 = vset.pattern.permute.xlu0 5
    %1365 = vperm.xlu0 %1364, %v301
    %v1366 = vpop.permute.xlu0 %1365
    %1368 = vset.pattern.permute.xlu0 5
    %1369 = vperm.xlu0 %1368, %v302
    %v1370 = vpop.permute.xlu0 %1369
    %1372 = vset.pattern.permute.xlu0 5
    %1373 = vperm.xlu0 %1372, %v303
    %v1374 = vpop.permute.xlu0 %1373
    %1376 = vset.pattern.permute.xlu0 5
    %1377 = vperm.xlu0 %1376, %v304
    %v1378 = vpop.permute.xlu0 %1377
    %1380 = vset.pattern.permute.xlu0 5
    %1381 = vperm.xlu0 %1380, %v305
    %v1382 = vpop.permute.xlu0 %1381
    %1384 = vset.pattern.permute.xlu0 5
    %1385 = vperm.xlu0 %1384, %v306
    %v1386 = vpop.permute.xlu0 %1385
    %1388 = vset.pattern.permute.xlu0 5
    %1389 = vperm.xlu0 %1388, %v307
    %v1390 = vpop.permute.xlu0 %1389
    %1392 = vset.pattern.permute.xlu0 5
    %1393 = vperm.xlu0 %1392, %v308
    %v1394 = vpop.permute.xlu0 %1393
    %1396 = vset.pattern.permute.xlu0 5
    %1397 = vperm.xlu0 %1396, %v309
    %v1398 = vpop.permute.xlu0 %1397
    %1400 = vset.pattern.permute.xlu0 5
    %1401 = vperm.xlu0 %1400, %v310
    %v1402 = vpop.permute.xlu0 %1401
    %1404 = vset.pattern.permute.xlu0 5
    %1405 = vperm.xlu0 %1404, %v311
    %v1406 = vpop.permute.xlu0 %1405
    %v1408 = vmul.f32 %v1346, %v1235
    %v1409 = vmul.f32 %v1350, %v1239
    %v1410 = vmul.f32 %v1354, %v1243
    %v1411 = vmul.f32 %v1358, %v1247
    %v1412 = vmul.f32 %v1362, %v1251
    %v1413 = vmul.f32 %v1366, %v1255
    %v1414 = vmul.f32 %v1370, %v1259
    %v1415 = vmul.f32 %v1374, %v1263
    %v1416 = vmul.f32 %v1378, %v1267
    %v1417 = vmul.f32 %v1382, %v1271
    %v1418 = vmul.f32 %v1386, %v1275
    %v1419 = vmul.f32 %v1390, %v1279
    %v1420 = vmul.f32 %v1394, %v1283
    %v1421 = vmul.f32 %v1398, %v1287
    %v1422 = vmul.f32 %v1402, %v1291
    %v1423 = vmul.f32 %v1406, %v1295
    %1440 = vrot.lane.b32.xlu0 %v1408, 96
    %v1441 = vpop.permute.xlu0 %1440
    %1442 = vrot.lane.b32.xlu0 %v1409, 96
    %v1443 = vpop.permute.xlu0 %1442
    %1444 = vrot.lane.b32.xlu0 %v1410, 96
    %v1445 = vpop.permute.xlu0 %1444
    %1446 = vrot.lane.b32.xlu0 %v1411, 96
    %v1447 = vpop.permute.xlu0 %1446
    %1448 = vrot.lane.b32.xlu0 %v1412, 96
    %v1449 = vpop.permute.xlu0 %1448
    %1450 = vrot.lane.b32.xlu0 %v1413, 96
    %v1451 = vpop.permute.xlu0 %1450
    %1452 = vrot.lane.b32.xlu0 %v1414, 96
    %v1453 = vpop.permute.xlu0 %1452
    %1454 = vrot.lane.b32.xlu0 %v1415, 96
    %v1455 = vpop.permute.xlu0 %1454
    %1456 = vrot.lane.b32.xlu0 %v1416, 96
    %v1457 = vpop.permute.xlu0 %1456
    %1458 = vrot.lane.b32.xlu0 %v1417, 96
    %v1459 = vpop.permute.xlu0 %1458
    %1460 = vrot.lane.b32.xlu0 %v1418, 96
    %v1461 = vpop.permute.xlu0 %1460
    %1462 = vrot.lane.b32.xlu0 %v1419, 96
    %v1463 = vpop.permute.xlu0 %1462
    %1464 = vrot.lane.b32.xlu0 %v1420, 96
    %v1465 = vpop.permute.xlu0 %1464
    %1466 = vrot.lane.b32.xlu0 %v1421, 96
    %v1467 = vpop.permute.xlu0 %1466
    %1468 = vrot.lane.b32.xlu0 %v1422, 96
    %v1469 = vpop.permute.xlu0 %1468
    %1470 = vrot.lane.b32.xlu0 %v1423, 96
    %v1471 = vpop.permute.xlu0 %1470
    %v1488 = vadd.f32 %v1328, %v1441
    %v1489 = vadd.f32 %v1329, %v1443
    %v1490 = vadd.f32 %v1330, %v1445
    %v1491 = vadd.f32 %v1331, %v1447
    %v1492 = vadd.f32 %v1332, %v1449
    %v1493 = vadd.f32 %v1333, %v1451
    %v1494 = vadd.f32 %v1334, %v1453
    %v1495 = vadd.f32 %v1335, %v1455
    %v1496 = vadd.f32 %v1336, %v1457
    %v1497 = vadd.f32 %v1337, %v1459
    %v1498 = vadd.f32 %v1338, %v1461
    %v1499 = vadd.f32 %v1339, %v1463
    %v1500 = vadd.f32 %v1340, %v1465
    %v1501 = vadd.f32 %v1341, %v1467
    %v1502 = vadd.f32 %v1342, %v1469
    %v1503 = vadd.f32 %v1343, %v1471
    %1504 = vset.pattern.permute.xlu0 6
    %1505 = vperm.xlu0 %1504, %v296
    %v1506 = vpop.permute.xlu0 %1505
    %1508 = vset.pattern.permute.xlu0 6
    %1509 = vperm.xlu0 %1508, %v297
    %v1510 = vpop.permute.xlu0 %1509
    %1512 = vset.pattern.permute.xlu0 6
    %1513 = vperm.xlu0 %1512, %v298
    %v1514 = vpop.permute.xlu0 %1513
    %1516 = vset.pattern.permute.xlu0 6
    %1517 = vperm.xlu0 %1516, %v299
    %v1518 = vpop.permute.xlu0 %1517
    %1520 = vset.pattern.permute.xlu0 6
    %1521 = vperm.xlu0 %1520, %v300
    %v1522 = vpop.permute.xlu0 %1521
    %1524 = vset.pattern.permute.xlu0 6
    %1525 = vperm.xlu0 %1524, %v301
    %v1526 = vpop.permute.xlu0 %1525
    %1528 = vset.pattern.permute.xlu0 6
    %1529 = vperm.xlu0 %1528, %v302
    %v1530 = vpop.permute.xlu0 %1529
    %1532 = vset.pattern.permute.xlu0 6
    %1533 = vperm.xlu0 %1532, %v303
    %v1534 = vpop.permute.xlu0 %1533
    %1536 = vset.pattern.permute.xlu0 6
    %1537 = vperm.xlu0 %1536, %v304
    %v1538 = vpop.permute.xlu0 %1537
    %1540 = vset.pattern.permute.xlu0 6
    %1541 = vperm.xlu0 %1540, %v305
    %v1542 = vpop.permute.xlu0 %1541
    %1544 = vset.pattern.permute.xlu0 6
    %1545 = vperm.xlu0 %1544, %v306
    %v1546 = vpop.permute.xlu0 %1545
    %1548 = vset.pattern.permute.xlu0 6
    %1549 = vperm.xlu0 %1548, %v307
    %v1550 = vpop.permute.xlu0 %1549
    %1552 = vset.pattern.permute.xlu0 6
    %1553 = vperm.xlu0 %1552, %v308
    %v1554 = vpop.permute.xlu0 %1553
    %1556 = vset.pattern.permute.xlu0 6
    %1557 = vperm.xlu0 %1556, %v309
    %v1558 = vpop.permute.xlu0 %1557
    %1560 = vset.pattern.permute.xlu0 6
    %1561 = vperm.xlu0 %1560, %v310
    %v1562 = vpop.permute.xlu0 %1561
    %1564 = vset.pattern.permute.xlu0 6
    %1565 = vperm.xlu0 %1564, %v311
    %v1566 = vpop.permute.xlu0 %1565
    %v1568 = vmul.f32 %v1506, %v1235
    %v1569 = vmul.f32 %v1510, %v1239
    %v1570 = vmul.f32 %v1514, %v1243
    %v1571 = vmul.f32 %v1518, %v1247
    %v1572 = vmul.f32 %v1522, %v1251
    %v1573 = vmul.f32 %v1526, %v1255
    %v1574 = vmul.f32 %v1530, %v1259
    %v1575 = vmul.f32 %v1534, %v1263
    %v1576 = vmul.f32 %v1538, %v1267
    %v1577 = vmul.f32 %v1542, %v1271
    %v1578 = vmul.f32 %v1546, %v1275
    %v1579 = vmul.f32 %v1550, %v1279
    %v1580 = vmul.f32 %v1554, %v1283
    %v1581 = vmul.f32 %v1558, %v1287
    %v1582 = vmul.f32 %v1562, %v1291
    %v1583 = vmul.f32 %v1566, %v1295
    %1600 = vrot.lane.b32.xlu0 %v1568, 64
    %v1601 = vpop.permute.xlu0 %1600
    %1602 = vrot.lane.b32.xlu0 %v1569, 64
    %v1603 = vpop.permute.xlu0 %1602
    %1604 = vrot.lane.b32.xlu0 %v1570, 64
    %v1605 = vpop.permute.xlu0 %1604
    %1606 = vrot.lane.b32.xlu0 %v1571, 64
    %v1607 = vpop.permute.xlu0 %1606
    %1608 = vrot.lane.b32.xlu0 %v1572, 64
    %v1609 = vpop.permute.xlu0 %1608
    %1610 = vrot.lane.b32.xlu0 %v1573, 64
    %v1611 = vpop.permute.xlu0 %1610
    %1612 = vrot.lane.b32.xlu0 %v1574, 64
    %v1613 = vpop.permute.xlu0 %1612
    %1614 = vrot.lane.b32.xlu0 %v1575, 64
    %v1615 = vpop.permute.xlu0 %1614
    %1616 = vrot.lane.b32.xlu0 %v1576, 64
    %v1617 = vpop.permute.xlu0 %1616
    %1618 = vrot.lane.b32.xlu0 %v1577, 64
    %v1619 = vpop.permute.xlu0 %1618
    %1620 = vrot.lane.b32.xlu0 %v1578, 64
    %v1621 = vpop.permute.xlu0 %1620
    %1622 = vrot.lane.b32.xlu0 %v1579, 64
    %v1623 = vpop.permute.xlu0 %1622
    %1624 = vrot.lane.b32.xlu0 %v1580, 64
    %v1625 = vpop.permute.xlu0 %1624
    %1626 = vrot.lane.b32.xlu0 %v1581, 64
    %v1627 = vpop.permute.xlu0 %1626
    %1628 = vrot.lane.b32.xlu0 %v1582, 64
    %v1629 = vpop.permute.xlu0 %1628
    %1630 = vrot.lane.b32.xlu0 %v1583, 64
    %v1631 = vpop.permute.xlu0 %1630
    %v1648 = vadd.f32 %v1488, %v1601
    %v1649 = vadd.f32 %v1489, %v1603
    %v1650 = vadd.f32 %v1490, %v1605
    %v1651 = vadd.f32 %v1491, %v1607
    %v1652 = vadd.f32 %v1492, %v1609
    %v1653 = vadd.f32 %v1493, %v1611
    %v1654 = vadd.f32 %v1494, %v1613
    %v1655 = vadd.f32 %v1495, %v1615
    %v1656 = vadd.f32 %v1496, %v1617
    %v1657 = vadd.f32 %v1497, %v1619
    %v1658 = vadd.f32 %v1498, %v1621
    %v1659 = vadd.f32 %v1499, %v1623
    %v1660 = vadd.f32 %v1500, %v1625
    %v1661 = vadd.f32 %v1501, %v1627
    %v1662 = vadd.f32 %v1502, %v1629
    %v1663 = vadd.f32 %v1503, %v1631
    %1664 = vset.pattern.permute.xlu0 7
    %1665 = vperm.xlu0 %1664, %v296
    %v1666 = vpop.permute.xlu0 %1665
    %1668 = vset.pattern.permute.xlu0 7
    %1669 = vperm.xlu0 %1668, %v297
    %v1670 = vpop.permute.xlu0 %1669
    %1672 = vset.pattern.permute.xlu0 7
    %1673 = vperm.xlu0 %1672, %v298
    %v1674 = vpop.permute.xlu0 %1673
    %1676 = vset.pattern.permute.xlu0 7
    %1677 = vperm.xlu0 %1676, %v299
    %v1678 = vpop.permute.xlu0 %1677
    %1680 = vset.pattern.permute.xlu0 7
    %1681 = vperm.xlu0 %1680, %v300
    %v1682 = vpop.permute.xlu0 %1681
    %1684 = vset.pattern.permute.xlu0 7
    %1685 = vperm.xlu0 %1684, %v301
    %v1686 = vpop.permute.xlu0 %1685
    %1688 = vset.pattern.permute.xlu0 7
    %1689 = vperm.xlu0 %1688, %v302
    %v1690 = vpop.permute.xlu0 %1689
    %1692 = vset.pattern.permute.xlu0 7
    %1693 = vperm.xlu0 %1692, %v303
    %v1694 = vpop.permute.xlu0 %1693
    %1696 = vset.pattern.permute.xlu0 7
    %1697 = vperm.xlu0 %1696, %v304
    %v1698 = vpop.permute.xlu0 %1697
    %1700 = vset.pattern.permute.xlu0 7
    %1701 = vperm.xlu0 %1700, %v305
    %v1702 = vpop.permute.xlu0 %1701
    %1704 = vset.pattern.permute.xlu0 7
    %1705 = vperm.xlu0 %1704, %v306
    %v1706 = vpop.permute.xlu0 %1705
    %1708 = vset.pattern.permute.xlu0 7
    %1709 = vperm.xlu0 %1708, %v307
    %v1710 = vpop.permute.xlu0 %1709
    %1712 = vset.pattern.permute.xlu0 7
    %1713 = vperm.xlu0 %1712, %v308
    %v1714 = vpop.permute.xlu0 %1713
    %1716 = vset.pattern.permute.xlu0 7
    %1717 = vperm.xlu0 %1716, %v309
    %v1718 = vpop.permute.xlu0 %1717
    %1720 = vset.pattern.permute.xlu0 7
    %1721 = vperm.xlu0 %1720, %v310
    %v1722 = vpop.permute.xlu0 %1721
    %1724 = vset.pattern.permute.xlu0 7
    %1725 = vperm.xlu0 %1724, %v311
    %v1726 = vpop.permute.xlu0 %1725
    %v1728 = vmul.f32 %v1666, %v1235
    %v1729 = vmul.f32 %v1670, %v1239
    %v1730 = vmul.f32 %v1674, %v1243
    %v1731 = vmul.f32 %v1678, %v1247
    %v1732 = vmul.f32 %v1682, %v1251
    %v1733 = vmul.f32 %v1686, %v1255
    %v1734 = vmul.f32 %v1690, %v1259
    %v1735 = vmul.f32 %v1694, %v1263
    %v1736 = vmul.f32 %v1698, %v1267
    %v1737 = vmul.f32 %v1702, %v1271
    %v1738 = vmul.f32 %v1706, %v1275
    %v1739 = vmul.f32 %v1710, %v1279
    %v1740 = vmul.f32 %v1714, %v1283
    %v1741 = vmul.f32 %v1718, %v1287
    %v1742 = vmul.f32 %v1722, %v1291
    %v1743 = vmul.f32 %v1726, %v1295
    %1760 = vrot.lane.b32.xlu0 %v1728, 32
    %v1761 = vpop.permute.xlu0 %1760
    %1762 = vrot.lane.b32.xlu0 %v1729, 32
    %v1763 = vpop.permute.xlu0 %1762
    %1764 = vrot.lane.b32.xlu0 %v1730, 32
    %v1765 = vpop.permute.xlu0 %1764
    %1766 = vrot.lane.b32.xlu0 %v1731, 32
    %v1767 = vpop.permute.xlu0 %1766
    %1768 = vrot.lane.b32.xlu0 %v1732, 32
    %v1769 = vpop.permute.xlu0 %1768
    %1770 = vrot.lane.b32.xlu0 %v1733, 32
    %v1771 = vpop.permute.xlu0 %1770
    %1772 = vrot.lane.b32.xlu0 %v1734, 32
    %v1773 = vpop.permute.xlu0 %1772
    %1774 = vrot.lane.b32.xlu0 %v1735, 32
    %v1775 = vpop.permute.xlu0 %1774
    %1776 = vrot.lane.b32.xlu0 %v1736, 32
    %v1777 = vpop.permute.xlu0 %1776
    %1778 = vrot.lane.b32.xlu0 %v1737, 32
    %v1779 = vpop.permute.xlu0 %1778
    %1780 = vrot.lane.b32.xlu0 %v1738, 32
    %v1781 = vpop.permute.xlu0 %1780
    %1782 = vrot.lane.b32.xlu0 %v1739, 32
    %v1783 = vpop.permute.xlu0 %1782
    %1784 = vrot.lane.b32.xlu0 %v1740, 32
    %v1785 = vpop.permute.xlu0 %1784
    %1786 = vrot.lane.b32.xlu0 %v1741, 32
    %v1787 = vpop.permute.xlu0 %1786
    %1788 = vrot.lane.b32.xlu0 %v1742, 32
    %v1789 = vpop.permute.xlu0 %1788
    %1790 = vrot.lane.b32.xlu0 %v1743, 32
    %v1791 = vpop.permute.xlu0 %1790
    %v1808 = vadd.f32 %v1648, %v1761
    %v1809 = vadd.f32 %v1649, %v1763
    %v1810 = vadd.f32 %v1650, %v1765
    %v1811 = vadd.f32 %v1651, %v1767
    %v1812 = vadd.f32 %v1652, %v1769
    %v1813 = vadd.f32 %v1653, %v1771
    %v1814 = vadd.f32 %v1654, %v1773
    %v1815 = vadd.f32 %v1655, %v1775
    %v1816 = vadd.f32 %v1656, %v1777
    %v1817 = vadd.f32 %v1657, %v1779
    %v1818 = vadd.f32 %v1658, %v1781
    %v1819 = vadd.f32 %v1659, %v1783
    %v1820 = vadd.f32 %v1660, %v1785
    %v1821 = vadd.f32 %v1661, %v1787
    %v1822 = vadd.f32 %v1662, %v1789
    %v1823 = vadd.f32 %v1663, %v1791
    %v1824 = vcombine.low %v1808, %v1810
    %v1825 = vcombine.high %v1808, %v1810
    %v1827 = vunpack.c.l.s4 1983009808
    %v1828 = vunpack.c.0.s8 %v1827
    %v1829 = vlaneseq
    %v1830 = vshrl.u32 %v1829, 7
    %v1831 = vsub.s32 %v1828, %v1830
    %v1832 = vrot.slane %v1824, %v1831
    %v1834 = vunpack.c.l.s4 1983009808
    %v1835 = vunpack.c.0.s8 %v1834
    %v1836 = vlaneseq
    %v1837 = vshrl.u32 %v1836, 7
    %v1838 = vsub.s32 %v1835, %v1837
    %v1839 = vrot.slane %v1825, %v1838
    %v1840 = vcombine.low %v1809, %v1811
    %v1841 = vcombine.high %v1809, %v1811
    %v1843 = vunpack.c.l.s4 1983009808
    %v1844 = vunpack.c.0.s8 %v1843
    %v1845 = vlaneseq
    %v1846 = vshrl.u32 %v1845, 7
    %v1847 = vsub.s32 %v1844, %v1846
    %v1848 = vrot.slane %v1840, %v1847
    %v1850 = vunpack.c.l.s4 1983009808
    %v1851 = vunpack.c.0.s8 %v1850
    %v1852 = vlaneseq
    %v1853 = vshrl.u32 %v1852, 7
    %v1854 = vsub.s32 %v1851, %v1853
    %v1855 = vrot.slane %v1841, %v1854
    %v1856 = vcombine.low %v1812, %v1814
    %v1857 = vcombine.high %v1812, %v1814
    %v1859 = vunpack.c.l.s4 1983009808
    %v1860 = vunpack.c.0.s8 %v1859
    %v1861 = vlaneseq
    %v1862 = vshrl.u32 %v1861, 7
    %v1863 = vsub.s32 %v1860, %v1862
    %v1864 = vrot.slane %v1856, %v1863
    %v1866 = vunpack.c.l.s4 1983009808
    %v1867 = vunpack.c.0.s8 %v1866
    %v1868 = vlaneseq
    %v1869 = vshrl.u32 %v1868, 7
    %v1870 = vsub.s32 %v1867, %v1869
    %v1871 = vrot.slane %v1857, %v1870
    %v1872 = vcombine.low %v1813, %v1815
    %v1873 = vcombine.high %v1813, %v1815
    %v1875 = vunpack.c.l.s4 1983009808
    %v1876 = vunpack.c.0.s8 %v1875
    %v1877 = vlaneseq
    %v1878 = vshrl.u32 %v1877, 7
    %v1879 = vsub.s32 %v1876, %v1878
    %v1880 = vrot.slane %v1872, %v1879
    %v1882 = vunpack.c.l.s4 1983009808
    %v1883 = vunpack.c.0.s8 %v1882
    %v1884 = vlaneseq
    %v1885 = vshrl.u32 %v1884, 7
    %v1886 = vsub.s32 %v1883, %v1885
    %v1887 = vrot.slane %v1873, %v1886
    %v1888 = vcombine.low %v1832, %v1848
    %v1889 = vcombine.high %v1832, %v1848
    %v1891 = vunpack.c.l.s4 1934713408
    %v1892 = vunpack.c.0.s8 %v1891
    %v1893 = vlaneseq
    %v1894 = vshrl.u32 %v1893, 7
    %v1895 = vsub.s32 %v1892, %v1894
    %v1896 = vrot.slane %v1888, %v1895
    %v1898 = vunpack.c.l.s4 1934713408
    %v1899 = vunpack.c.0.s8 %v1898
    %v1900 = vlaneseq
    %v1901 = vshrl.u32 %v1900, 7
    %v1902 = vsub.s32 %v1899, %v1901
    %v1903 = vrot.slane %v1889, %v1902
    %v1904 = vcombine.low %v1839, %v1855
    %v1905 = vcombine.high %v1839, %v1855
    %v1907 = vunpack.c.l.s4 1934713408
    %v1908 = vunpack.c.0.s8 %v1907
    %v1909 = vlaneseq
    %v1910 = vshrl.u32 %v1909, 7
    %v1911 = vsub.s32 %v1908, %v1910
    %v1912 = vrot.slane %v1904, %v1911
    %v1914 = vunpack.c.l.s4 1934713408
    %v1915 = vunpack.c.0.s8 %v1914
    %v1916 = vlaneseq
    %v1917 = vshrl.u32 %v1916, 7
    %v1918 = vsub.s32 %v1915, %v1917
    %v1919 = vrot.slane %v1905, %v1918
    %v1920 = vcombine.low %v1864, %v1880
    %v1921 = vcombine.high %v1864, %v1880
    %v1923 = vunpack.c.l.s4 1934713408
    %v1924 = vunpack.c.0.s8 %v1923
    %v1925 = vlaneseq
    %v1926 = vshrl.u32 %v1925, 7
    %v1927 = vsub.s32 %v1924, %v1926
    %v1928 = vrot.slane %v1920, %v1927
    %v1930 = vunpack.c.l.s4 1934713408
    %v1931 = vunpack.c.0.s8 %v1930
    %v1932 = vlaneseq
    %v1933 = vshrl.u32 %v1932, 7
    %v1934 = vsub.s32 %v1931, %v1933
    %v1935 = vrot.slane %v1921, %v1934
    %v1936 = vcombine.low %v1871, %v1887
    %v1937 = vcombine.high %v1871, %v1887
    %v1939 = vunpack.c.l.s4 1934713408
    %v1940 = vunpack.c.0.s8 %v1939
    %v1941 = vlaneseq
    %v1942 = vshrl.u32 %v1941, 7
    %v1943 = vsub.s32 %v1940, %v1942
    %v1944 = vrot.slane %v1936, %v1943
    %v1946 = vunpack.c.l.s4 1934713408
    %v1947 = vunpack.c.0.s8 %v1946
    %v1948 = vlaneseq
    %v1949 = vshrl.u32 %v1948, 7
    %v1950 = vsub.s32 %v1947, %v1949
    %v1951 = vrot.slane %v1937, %v1950
    %v1952 = vcombine.low %v1896, %v1928
    %v1953 = vcombine.high %v1896, %v1928
    %v1954 = vcombine.low %v1903, %v1935
    %v1955 = vcombine.high %v1903, %v1935
    %v1956 = vcombine.low %v1912, %v1944
    %v1957 = vcombine.high %v1912, %v1944
    %v1958 = vcombine.low %v1919, %v1951
    %v1959 = vcombine.high %v1919, %v1951
    %v1960 = vcombine.low %v1816, %v1818
    %v1961 = vcombine.high %v1816, %v1818
    %v1963 = vunpack.c.l.s4 1983009808
    %v1964 = vunpack.c.0.s8 %v1963
    %v1965 = vlaneseq
    %v1966 = vshrl.u32 %v1965, 7
    %v1967 = vsub.s32 %v1964, %v1966
    %v1968 = vrot.slane %v1960, %v1967
    %v1970 = vunpack.c.l.s4 1983009808
    %v1971 = vunpack.c.0.s8 %v1970
    %v1972 = vlaneseq
    %v1973 = vshrl.u32 %v1972, 7
    %v1974 = vsub.s32 %v1971, %v1973
    %v1975 = vrot.slane %v1961, %v1974
    %v1976 = vcombine.low %v1817, %v1819
    %v1977 = vcombine.high %v1817, %v1819
    %v1979 = vunpack.c.l.s4 1983009808
    %v1980 = vunpack.c.0.s8 %v1979
    %v1981 = vlaneseq
    %v1982 = vshrl.u32 %v1981, 7
    %v1983 = vsub.s32 %v1980, %v1982
    %v1984 = vrot.slane %v1976, %v1983
    %v1986 = vunpack.c.l.s4 1983009808
    %v1987 = vunpack.c.0.s8 %v1986
    %v1988 = vlaneseq
    %v1989 = vshrl.u32 %v1988, 7
    %v1990 = vsub.s32 %v1987, %v1989
    %v1991 = vrot.slane %v1977, %v1990
    %v1992 = vcombine.low %v1820, %v1822
    %v1993 = vcombine.high %v1820, %v1822
    %v1995 = vunpack.c.l.s4 1983009808
    %v1996 = vunpack.c.0.s8 %v1995
    %v1997 = vlaneseq
    %v1998 = vshrl.u32 %v1997, 7
    %v1999 = vsub.s32 %v1996, %v1998
    %v2000 = vrot.slane %v1992, %v1999
    %v2002 = vunpack.c.l.s4 1983009808
    %v2003 = vunpack.c.0.s8 %v2002
    %v2004 = vlaneseq
    %v2005 = vshrl.u32 %v2004, 7
    %v2006 = vsub.s32 %v2003, %v2005
    %v2007 = vrot.slane %v1993, %v2006
    %v2008 = vcombine.low %v1821, %v1823
    %v2009 = vcombine.high %v1821, %v1823
    %v2011 = vunpack.c.l.s4 1983009808
    %v2012 = vunpack.c.0.s8 %v2011
    %v2013 = vlaneseq
    %v2014 = vshrl.u32 %v2013, 7
    %v2015 = vsub.s32 %v2012, %v2014
    %v2016 = vrot.slane %v2008, %v2015
    %v2018 = vunpack.c.l.s4 1983009808
    %v2019 = vunpack.c.0.s8 %v2018
    %v2020 = vlaneseq
    %v2021 = vshrl.u32 %v2020, 7
    %v2022 = vsub.s32 %v2019, %v2021
    %v2023 = vrot.slane %v2009, %v2022
    %v2024 = vcombine.low %v1968, %v1984
    %v2025 = vcombine.high %v1968, %v1984
    %v2027 = vunpack.c.l.s4 1934713408
    %v2028 = vunpack.c.0.s8 %v2027
    %v2029 = vlaneseq
    %v2030 = vshrl.u32 %v2029, 7
    %v2031 = vsub.s32 %v2028, %v2030
    %v2032 = vrot.slane %v2024, %v2031
    %v2034 = vunpack.c.l.s4 1934713408
    %v2035 = vunpack.c.0.s8 %v2034
    %v2036 = vlaneseq
    %v2037 = vshrl.u32 %v2036, 7
    %v2038 = vsub.s32 %v2035, %v2037
    %v2039 = vrot.slane %v2025, %v2038
    %v2040 = vcombine.low %v1975, %v1991
    %v2041 = vcombine.high %v1975, %v1991
    %v2043 = vunpack.c.l.s4 1934713408
    %v2044 = vunpack.c.0.s8 %v2043
    %v2045 = vlaneseq
    %v2046 = vshrl.u32 %v2045, 7
    %v2047 = vsub.s32 %v2044, %v2046
    %v2048 = vrot.slane %v2040, %v2047
    %v2050 = vunpack.c.l.s4 1934713408
    %v2051 = vunpack.c.0.s8 %v2050
    %v2052 = vlaneseq
    %v2053 = vshrl.u32 %v2052, 7
    %v2054 = vsub.s32 %v2051, %v2053
    %v2055 = vrot.slane %v2041, %v2054
    %v2056 = vcombine.low %v2000, %v2016
    %v2057 = vcombine.high %v2000, %v2016
    %v2059 = vunpack.c.l.s4 1934713408
    %v2060 = vunpack.c.0.s8 %v2059
    %v2061 = vlaneseq
    %v2062 = vshrl.u32 %v2061, 7
    %v2063 = vsub.s32 %v2060, %v2062
    %v2064 = vrot.slane %v2056, %v2063
    %v2066 = vunpack.c.l.s4 1934713408
    %v2067 = vunpack.c.0.s8 %v2066
    %v2068 = vlaneseq
    %v2069 = vshrl.u32 %v2068, 7
    %v2070 = vsub.s32 %v2067, %v2069
    %v2071 = vrot.slane %v2057, %v2070
    %v2072 = vcombine.low %v2007, %v2023
    %v2073 = vcombine.high %v2007, %v2023
    %v2075 = vunpack.c.l.s4 1934713408
    %v2076 = vunpack.c.0.s8 %v2075
    %v2077 = vlaneseq
    %v2078 = vshrl.u32 %v2077, 7
    %v2079 = vsub.s32 %v2076, %v2078
    %v2080 = vrot.slane %v2072, %v2079
    %v2082 = vunpack.c.l.s4 1934713408
    %v2083 = vunpack.c.0.s8 %v2082
    %v2084 = vlaneseq
    %v2085 = vshrl.u32 %v2084, 7
    %v2086 = vsub.s32 %v2083, %v2085
    %v2087 = vrot.slane %v2073, %v2086
    %v2088 = vcombine.low %v2032, %v2064
    %v2089 = vcombine.high %v2032, %v2064
    %v2090 = vcombine.low %v2039, %v2071
    %v2091 = vcombine.high %v2039, %v2071
    %v2092 = vcombine.low %v2048, %v2080
    %v2093 = vcombine.high %v2048, %v2080
    %v2094 = vcombine.low %v2055, %v2087
    %v2095 = vcombine.high %v2055, %v2087
    %2098 = vrot.lane.b32.xlu0 %v1953, 32
    %v2099 = vpop.permute.xlu0 %2098
    %2100 = vrot.lane.b32.xlu0 %v2089, 32
    %v2101 = vpop.permute.xlu0 %2100
    %2106 = vrot.lane.b32.xlu0 %v1954, 64
    %v2107 = vpop.permute.xlu0 %2106
    %2108 = vrot.lane.b32.xlu0 %v2090, 64
    %v2109 = vpop.permute.xlu0 %2108
    %2114 = vrot.lane.b32.xlu0 %v1955, 96
    %v2115 = vpop.permute.xlu0 %2114
    %2116 = vrot.lane.b32.xlu0 %v2091, 96
    %v2117 = vpop.permute.xlu0 %2116
    %2122 = vrot.lane.b32.xlu0 %v1957, 32
    %v2123 = vpop.permute.xlu0 %2122
    %2124 = vrot.lane.b32.xlu0 %v2093, 32
    %v2125 = vpop.permute.xlu0 %2124
    %2130 = vrot.lane.b32.xlu0 %v1958, 64
    %v2131 = vpop.permute.xlu0 %2130
    %2132 = vrot.lane.b32.xlu0 %v2094, 64
    %v2133 = vpop.permute.xlu0 %2132
    %2138 = vrot.lane.b32.xlu0 %v1959, 96
    %v2139 = vpop.permute.xlu0 %2138
    %2140 = vrot.lane.b32.xlu0 %v2095, 96
    %v2141 = vpop.permute.xlu0 %2140
    %vm2144 = vcmask 261120
    %v2145 = vsel %vm2144, %v1952, %v2099
    %v2146 = vsel %vm2144, %v2088, %v2101
    %vm2147 = vcmask 523264
    %v2148 = vsel %vm2147, %v2145, %v2107
    %v2149 = vsel %vm2147, %v2146, %v2109
    %vm2150 = vcmask 785408
    %v2151 = vsel %vm2150, %v2148, %v2115
    %v2152 = vsel %vm2150, %v2149, %v2117
    %v2153 = vsel %vm2144, %v1956, %v2123
    %v2154 = vsel %vm2144, %v2092, %v2125
    %v2155 = vsel %vm2147, %v2153, %v2131
    %v2156 = vsel %vm2147, %v2154, %v2133
    %v2157 = vsel %vm2150, %v2155, %v2139
    %v2158 = vsel %vm2150, %v2156, %v2141
    %v2159 = vpack.c.bf16 %v2152, %v2151
    %v2160 = vpack.c.bf16 %v2158, %v2157
    %v2161 = vld [vmem:[#allocation5] sm:$0xff]
    %v2162 = vld [vmem:[#allocation5 + $0x8] sm:$0xff]
    %v2163 = vld [vmem:[#allocation5 + $0x10] sm:$0xff]
    %v2164 = vld [vmem:[#allocation5 + $0x18] sm:$0xff]
    %v2165 = vld [vmem:[#allocation5 + $0x20] sm:$0xff]
    %v2166 = vld [vmem:[#allocation5 + $0x28] sm:$0xff]
    %v2167 = vld [vmem:[#allocation5 + $0x30] sm:$0xff]
    %v2168 = vld [vmem:[#allocation5 + $0x38] sm:$0xff]
    %v2169 = vld [vmem:[#allocation5 + $0x40] sm:$0xff]
    %v2170 = vld [vmem:[#allocation5 + $0x48] sm:$0xff]
    %v2171 = vld [vmem:[#allocation5 + $0x50] sm:$0xff]
    %v2172 = vld [vmem:[#allocation5 + $0x58] sm:$0xff]
    %v2173 = vld [vmem:[#allocation5 + $0x60] sm:$0xff]
    %v2174 = vld [vmem:[#allocation5 + $0x68] sm:$0xff]
    %v2175 = vld [vmem:[#allocation5 + $0x70] sm:$0xff]
    %v2176 = vld [vmem:[#allocation5 + $0x78] sm:$0xff]
    %v2177 = vld [vmem:[#allocation5 + $0x80] sm:$0xff]
    %v2178 = vld [vmem:[#allocation5 + $0x88] sm:$0xff]
    %v2179 = vld [vmem:[#allocation5 + $0x90] sm:$0xff]
    %v2180 = vld [vmem:[#allocation5 + $0x98] sm:$0xff]
    %v2181 = vld [vmem:[#allocation5 + $0xa0] sm:$0xff]
    %v2182 = vld [vmem:[#allocation5 + $0xa8] sm:$0xff]
    %v2183 = vld [vmem:[#allocation5 + $0xb0] sm:$0xff]
    %v2184 = vld [vmem:[#allocation5 + $0xb8] sm:$0xff]
    %v2185 = vld [vmem:[#allocation5 + $0xc0] sm:$0xff]
    %v2186 = vld [vmem:[#allocation5 + $0xc8] sm:$0xff]
    %v2187 = vld [vmem:[#allocation5 + $0xd0] sm:$0xff]
    %v2188 = vld [vmem:[#allocation5 + $0xd8] sm:$0xff]
    %v2189 = vld [vmem:[#allocation5 + $0xe0] sm:$0xff]
    %v2190 = vld [vmem:[#allocation5 + $0xe8] sm:$0xff]
    %v2191 = vld [vmem:[#allocation5 + $0xf0] sm:$0xff]
    %v2192 = vld [vmem:[#allocation5 + $0xf8] sm:$0xff]
    %v2193 = vld [vmem:[%s4] sm:$0x3]
    %v2195 = vlaneseq
    %v2196 = vshrl.u32 %v2195, 7
    %v2197 = vsub.s32 0, %v2196
    %v2198 = vrot.slane %v2193, %v2197
    %v2199 = vlaneseq
    %v2200 = vshrl.u32 %v2199, 7
    %v2201 = vsub.s32 1, %v2200
    %v2202 = vrot.slane %v2193, %v2201
    %v2237 = vunpack.c.l.b16 %v2161
    %v2238 = vunpack.c.h.b16 %v2161
    %v2239 = vunpack.c.l.b16 %v2162
    %v2240 = vunpack.c.h.b16 %v2162
    %v2241 = vunpack.c.l.b16 %v2163
    %v2242 = vunpack.c.h.b16 %v2163
    %v2243 = vunpack.c.l.b16 %v2164
    %v2244 = vunpack.c.h.b16 %v2164
    %v2245 = vunpack.c.l.b16 %v2165
    %v2246 = vunpack.c.h.b16 %v2165
    %v2247 = vunpack.c.l.b16 %v2166
    %v2248 = vunpack.c.h.b16 %v2166
    %v2249 = vunpack.c.l.b16 %v2167
    %v2250 = vunpack.c.h.b16 %v2167
    %v2251 = vunpack.c.l.b16 %v2168
    %v2252 = vunpack.c.h.b16 %v2168
    %v2253 = vunpack.c.l.b16 %v2169
    %v2254 = vunpack.c.h.b16 %v2169
    %v2255 = vunpack.c.l.b16 %v2170
    %v2256 = vunpack.c.h.b16 %v2170
    %v2257 = vunpack.c.l.b16 %v2171
    %v2258 = vunpack.c.h.b16 %v2171
    %v2259 = vunpack.c.l.b16 %v2172
    %v2260 = vunpack.c.h.b16 %v2172
    %v2261 = vunpack.c.l.b16 %v2173
    %v2262 = vunpack.c.h.b16 %v2173
    %v2263 = vunpack.c.l.b16 %v2174
    %v2264 = vunpack.c.h.b16 %v2174
    %v2265 = vunpack.c.l.b16 %v2175
    %v2266 = vunpack.c.h.b16 %v2175
    %v2267 = vunpack.c.l.b16 %v2176
    %v2268 = vunpack.c.h.b16 %v2176
    %v2269 = vunpack.c.l.b16 %v2177
    %v2270 = vunpack.c.h.b16 %v2177
    %v2271 = vunpack.c.l.b16 %v2178
    %v2272 = vunpack.c.h.b16 %v2178
    %v2273 = vunpack.c.l.b16 %v2179
    %v2274 = vunpack.c.h.b16 %v2179
    %v2275 = vunpack.c.l.b16 %v2180
    %v2276 = vunpack.c.h.b16 %v2180
    %v2277 = vunpack.c.l.b16 %v2181
    %v2278 = vunpack.c.h.b16 %v2181
    %v2279 = vunpack.c.l.b16 %v2182
    %v2280 = vunpack.c.h.b16 %v2182
    %v2281 = vunpack.c.l.b16 %v2183
    %v2282 = vunpack.c.h.b16 %v2183
    %v2283 = vunpack.c.l.b16 %v2184
    %v2284 = vunpack.c.h.b16 %v2184
    %v2285 = vunpack.c.l.b16 %v2185
    %v2286 = vunpack.c.h.b16 %v2185
    %v2287 = vunpack.c.l.b16 %v2186
    %v2288 = vunpack.c.h.b16 %v2186
    %v2289 = vunpack.c.l.b16 %v2187
    %v2290 = vunpack.c.h.b16 %v2187
    %v2291 = vunpack.c.l.b16 %v2188
    %v2292 = vunpack.c.h.b16 %v2188
    %v2293 = vunpack.c.l.b16 %v2189
    %v2294 = vunpack.c.h.b16 %v2189
    %v2295 = vunpack.c.l.b16 %v2190
    %v2296 = vunpack.c.h.b16 %v2190
    %v2297 = vunpack.c.l.b16 %v2191
    %v2298 = vunpack.c.h.b16 %v2191
    %v2299 = vunpack.c.l.b16 %v2192
    %v2300 = vunpack.c.h.b16 %v2192
    %v2301 = vpack.c.b16 %v2239, %v2237
    %v2302 = vpack.c.b16 %v2240, %v2238
    %v2303 = vpack.c.b16 %v2243, %v2241
    %v2304 = vpack.c.b16 %v2244, %v2242
    %v2305 = vpack.c.b16 %v2247, %v2245
    %v2306 = vpack.c.b16 %v2248, %v2246
    %v2307 = vpack.c.b16 %v2251, %v2249
    %v2308 = vpack.c.b16 %v2252, %v2250
    %v2309 = vpack.c.b16 %v2255, %v2253
    %v2310 = vpack.c.b16 %v2256, %v2254
    %v2311 = vpack.c.b16 %v2259, %v2257
    %v2312 = vpack.c.b16 %v2260, %v2258
    %v2313 = vpack.c.b16 %v2263, %v2261
    %v2314 = vpack.c.b16 %v2264, %v2262
    %v2315 = vpack.c.b16 %v2267, %v2265
    %v2316 = vpack.c.b16 %v2268, %v2266
    %v2317 = vpack.c.b16 %v2271, %v2269
    %v2318 = vpack.c.b16 %v2272, %v2270
    %v2319 = vpack.c.b16 %v2275, %v2273
    %v2320 = vpack.c.b16 %v2276, %v2274
    %v2321 = vpack.c.b16 %v2279, %v2277
    %v2322 = vpack.c.b16 %v2280, %v2278
    %v2323 = vpack.c.b16 %v2283, %v2281
    %v2324 = vpack.c.b16 %v2284, %v2282
    %v2325 = vpack.c.b16 %v2287, %v2285
    %v2326 = vpack.c.b16 %v2288, %v2286
    %v2327 = vpack.c.b16 %v2291, %v2289
    %v2328 = vpack.c.b16 %v2292, %v2290
    %v2329 = vpack.c.b16 %v2295, %v2293
    %v2330 = vpack.c.b16 %v2296, %v2294
    %v2331 = vpack.c.b16 %v2299, %v2297
    %v2332 = vpack.c.b16 %v2300, %v2298
    %2365 = vmatprep.subr.bf16.mxu0 %v2316
    %2366 = vmatpush1.bf16.msra.mxu0 %v2315
    %2367 = vmatprep.subr.bf16.mxu0 %v2314
    %2368 = vmatpush1.bf16.msra.mxu0 %v2313
    %2369 = vmatprep.subr.bf16.mxu0 %v2312
    %2370 = vmatpush1.bf16.msra.mxu0 %v2311
    %2371 = vmatprep.subr.bf16.mxu0 %v2310
    %2372 = vmatpush1.bf16.msra.mxu0 %v2309
    %2373 = vmatprep.subr.bf16.mxu0 %v2308
    %2374 = vmatpush1.bf16.msra.mxu0 %v2307
    %2375 = vmatprep.subr.bf16.mxu0 %v2306
    %2376 = vmatpush1.bf16.msra.mxu0 %v2305
    %2377 = vmatprep.subr.bf16.mxu0 %v2304
    %2378 = vmatpush1.bf16.msra.mxu0 %v2303
    %2379 = vmatprep.subr.bf16.mxu0 %v2302
    %2380 = vmatpush1.bf16.msra.mxu0 %v2301
    %2381 = vmatprep.subr.bf16.mxu0 %v2332
    %2382 = vmatpush2.bf16.msra.mxu0 %v2331
    %2383 = vmatprep.subr.bf16.mxu0 %v2330
    %2384 = vmatpush2.bf16.msra.mxu0 %v2329
    %2385 = vmatprep.subr.bf16.mxu0 %v2328
    %2386 = vmatpush2.bf16.msra.mxu0 %v2327
    %2387 = vmatprep.subr.bf16.mxu0 %v2326
    %2388 = vmatpush2.bf16.msra.mxu0 %v2325
    %2389 = vmatprep.subr.bf16.mxu0 %v2324
    %2390 = vmatpush2.bf16.msra.mxu0 %v2323
    %2391 = vmatprep.subr.bf16.mxu0 %v2322
    %2392 = vmatpush2.bf16.msra.mxu0 %v2321
    %2393 = vmatprep.subr.bf16.mxu0 %v2320
    %2394 = vmatpush2.bf16.msra.mxu0 %v2319
    %2395 = vmatprep.subr.bf16.mxu0 %v2318
    %2396 = vmatpush2.bf16.msra.mxu0 %v2317
    %2397 = vmatprep.mubr.bf16.mxu0 %v2160
    %2398 = vmatmul.mubr.bf16.gmra.mxu0 %v2159
    %v2399 = vpop.f32.mrf.mxu0
    %v2400 = vadd.f32 %v2198, %v2399
    %v2401 = vpop.f32.mrf.mxu0
    %v2402 = vadd.f32 %v2202, %v2401
    %v2403 = vpop.f32.mrf.mxu0
    %v2404 = vadd.f32 %v2198, %v2403
    %v2405 = vpop.f32.mrf.mxu0
    %v2406 = vadd.f32 %v2202, %v2405
    %2407 = vdwg.mxu0
    %2408 = vst [vmem:[#allocation7] sm:$0xff] %v2400
    %2409 = vst [vmem:[#allocation7 + $0x8] sm:$0xff] %v2402
    %2410 = vst [vmem:[#allocation7 + $0x10] sm:$0xff] %v2404
    %2411 = vst [vmem:[#allocation7 + $0x18] sm:$0xff] %v2406
    // Predicated region
    $region30: #{tpu_custom_call.1} parent=1 // pred_check
      _
    $region31: #{tpu_custom_call.1} parent=1 // pred_check_branch
      %2413 = sbr.rel (0) target = $region33
    $region32: #{tpu_custom_call.1} parent=1 // pred_region
      %s2415 = ssub.s32 512, 512
      %2416 = vsyncadd [#allocation4], %s2415
      %s2417 = sshll.u32 [#allocation7], 4
      %s2418 = int_to_ptr.vmem [resolvable:$true] %s2417
      %2423 = dma.vmem_to_hbm [thread:$0]  %s2418, 512, %s5, [#allocation4], 256, 256, 16
    $region33: #{tpu_custom_call.1} parent=1 // pred_fallthru
      _
    // Predicated region
    $region34: #{tpu_custom_call.1} parent=1 // pred_check
      _
    $region35: #{tpu_custom_call.1} parent=1 // pred_check_branch
      %2425 = sbr.rel (0) target = $region37
    $region36: #{tpu_custom_call.1} parent=1 // pred_region
      %2426 = dma.done [#allocation4], 512
    $region37: #{tpu_custom_call.1} parent=1 // pred_fallthru
      _
    %2427 = vsyncpa [#allocation3], 1
    %2428 = vsyncpa [#allocation6], 1
    %2429 = vsyncpa [#allocation4], 1

</llo_original>
